<compile_context>
chip_gen: v7x
topology: tpu7x:2x2x1
jax: 0.10.0
libtpu: 0.0.40
codegen_flags: <defaults>
</compile_context>

<pallas_src>
import jax
import jax.numpy as jnp
import numpy as np
from jax.experimental import pallas as pl
from jax.experimental.pallas import tpu as pltpu


# ----------------------------- in-kernel helpers -----------------------------

def _erf(x):
    # Abramowitz & Stegun 7.1.26 rational approximation (|err| < ~1e-4 with the
    # approx reciprocal; branch output is scaled by LayerScale=1e-5 downstream).
    a1, a2, a3, a4, a5 = 0.254829592, -0.284496736, 1.421413741, -1.453152027, 1.061405429
    p = 0.3275911
    ax = jnp.abs(x)
    # approx reciprocal -> single EUP op in an otherwise idle slot (vs. a VPU
    # Newton divide over the largest element-wise tensor in the kernel).
    t = pl.reciprocal(1.0 + p * ax, approx=True)
    poly = ((((a5 * t + a4) * t + a3) * t + a2) * t + a1) * t
    y = 1.0 - poly * jnp.exp(-ax * ax)
    return jnp.where(x >= 0, y, -y)


def _gelu_exact(x):
    # torch.nn.GELU() default (erf form)
    return 0.5 * x * (1.0 + _erf(x * (1.0 / np.sqrt(2.0))))


# Row layout of the packed f32 "vector" parameter array (width = 3F, zero pad).
_VEC_ROWS = (
    "ln1_g", "ln1_b",
    "b1_val", "b1_gate",
    "bd1",
    "b2",            # BatchNorm folded in
    "b3",            # ls1 folded in
    "ln2_g", "ln2_b",
    "bg1_val", "bg1_gate",
    "bdg_val", "bdg_gate",
    "bg2",           # ls2 folded in
)
_R = {name: i for i, name in enumerate(_VEC_ROWS)}
_N_VEC = len(_VEC_ROWS)   # 14; conv taps are appended after these rows.


# --------------------------------- kernel ------------------------------------

def _make_kernel(bb, T, F, K):
    H2, H3 = 2 * F, 3 * F
    M = bb * T
    R_WD1 = _N_VEC                 # K rows, width F
    R_WDG_VAL = _N_VEC + K         # 3 rows, width 3F
    R_WDG_GATE = _N_VEC + K + 3    # 3 rows, width 3F

    def kernel(x_ref, w1v_ref, w1g_ref, w2_ref, w3_ref,
               wg1v_ref, wg1g_ref, wg2_ref, pv_ref,
               out_ref, cbuf1, cbufg):

        def vec(row, width):
            # (1, width) f32 slice of the packed parameter array
            return pv_ref[row:row + 1, :width]

        def layer_norm(v, g, b, eps=1e-5):
            mu = jnp.mean(v, axis=-1, keepdims=True)
            # single pass over v; the two XLU reductions can overlap
            var = jnp.mean(v * v, axis=-1, keepdims=True) - mu * mu
            return (v - mu) * jax.lax.rsqrt(var + eps) * g + b

        def dwconv(v, tap_row0, n_taps, bias_row, buf_ref, C):
            # 'same' depthwise conv over T (zero padded), per batch element.
            # v: (bb, T, C) f32; buf_ref: (bb, T + n_taps - 1, C) VMEM scratch.
            pad = (n_taps - 1) // 2
            # Zero ONLY the pad boundary rows (cheap); the interior is fully
            # overwritten below.  Re-done each call so the kernel is correct
            # even when the parallel grid axis is split across TensorCores.
            if pad > 0:
                zrow = jnp.zeros((bb, pad, C), jnp.float32)
                buf_ref[:, 0:pad, :] = zrow
                buf_ref[:, pad + T:pad + T + pad, :] = zrow
            buf_ref[:, pad:pad + T, :] = v
            acc = vec(tap_row0, C) * buf_ref[:, 0:T, :]
            for k in range(1, n_taps):               # static slices of the scratch ref
                acc = acc + vec(tap_row0 + k, C) * buf_ref[:, k:k + T, :]
            return acc + vec(bias_row, C)

        x = x_ref[...].reshape(M, F)                 # (M, F) f32 slab for matmuls

        # ---- LayerNorm 1 (f32) ----
        xn = layer_norm(x, vec(_R["ln1_g"], F), vec(_R["ln1_b"], F))
        xn_b = xn.astype(jnp.bfloat16)

        # ---- CLA: pconv1 + GLU (value / gate weight halves, no lane slicing) ----
        hv = jnp.dot(xn_b, w1v_ref[...], preferred_element_type=jnp.float32) + vec(_R["b1_val"], F)
        hg = jnp.dot(xn_b, w1g_ref[...], preferred_element_type=jnp.float32) + vec(_R["b1_gate"], F)
        h = hv * jax.nn.sigmoid(hg)                  # (M, F) f32

        # ---- CLA: depthwise conv over T ----
        h = dwconv(h.reshape(bb, T, F), R_WD1, K, _R["bd1"], cbuf1, F).reshape(M, F)

        # ---- CLA: pconv2 (BatchNorm folded), GELU, pconv3 (ls1 folded) ----
        h = jnp.dot(h.astype(jnp.bfloat16), w2_ref[...],
                    preferred_element_type=jnp.float32) + vec(_R["b2"], H2)
        h = _gelu_exact(h)
        h = jnp.dot(h.astype(jnp.bfloat16), w3_ref[...],
                    preferred_element_type=jnp.float32) + vec(_R["b3"], F)

        out1 = xn + h + x                            # CLA residual + block residual

        # ---- LayerNorm 2 (f32) ----
        on = layer_norm(out1, vec(_R["ln2_g"], F), vec(_R["ln2_b"], F))
        on_b = on.astype(jnp.bfloat16)

        # ---- GCFN: pconv1 (value/gate halves) -> dconv -> GLU -> pconv2 (ls2 folded) ----
        gv = jnp.dot(on_b, wg1v_ref[...], preferred_element_type=jnp.float32) + vec(_R["bg1_val"], H3)
        gg = jnp.dot(on_b, wg1g_ref[...], preferred_element_type=jnp.float32) + vec(_R["bg1_gate"], H3)
        # the two GCFN convs run sequentially -> one shared pad-scratch buffer
        gv = dwconv(gv.reshape(bb, T, H3), R_WDG_VAL, 3, _R["bdg_val"], cbufg, H3)
        gg = dwconv(gg.reshape(bb, T, H3), R_WDG_GATE, 3, _R["bdg_gate"], cbufg, H3)
        g = (gv * jax.nn.sigmoid(gg)).reshape(M, H3)
        g = jnp.dot(g.astype(jnp.bfloat16), wg2_ref[...],
                    preferred_element_type=jnp.float32) + vec(_R["bg2"], F)

        out2 = on + g + out1

        # lane-dense (.., T, F) store; the (B, F, T) transpose happens in XLA.
        out_ref[...] = out2.reshape(bb, T, F)

    return kernel


# --------------------------------- wrapper -----------------------------------

def _vmem_limit_bytes():
    # Derive the scoped-VMEM limit from the chip: <= 64 MiB, and ~3/4 of the
    # physical capacity (v7x parts only have 64 MiB physical -> ~48 MiB).
    try:
        cap = int(pltpu.get_tpu_info().vmem_capacity_bytes)
    except Exception:
        cap = 128 * 1024 * 1024
    return min(64 * 1024 * 1024, cap * 3 // 4)


def _vmem_estimate(bb, T, F, K):
    # Rough per-step live-set estimate used to cap bb.
    f32, bf16 = 4, 2
    M = bb * T
    io = 2 * 2 * bb * T * F * f32                                  # x/out, double-buffered
    scratch = bb * (T + K - 1) * F * f32 + bb * (T + 2) * 3 * F * f32
    temps = 8 * M * 3 * F * f32                                    # gv/gg/g/h-class f32 temporaries
    weights = 2 * bf16 * 15 * F * F                                # all matmul weights, double-buffered
    vectors = 2 * (_N_VEC + K + 6) * 3 * F * f32
    return io + scratch + temps + weights + vectors


def _pick_batch_block(B, T, F, K, vmem_budget, target_rows=512, min_grid=2):
    # Target ~512 M-rows per step (fills v6e/v7x's 256-wide MXU), but keep the
    # grid length >= min_grid (so v7x's two TensorCores both get work) and stay
    # inside the VMEM budget.  bb must divide B.
    bb = min(B, max(1, target_rows // max(T, 1)))
    if min_grid > 1 and B >= min_grid:
        bb = min(bb, B // min_grid)
    bb = max(bb, 1)
    while B % bb:
        bb -= 1
    while bb > 1 and _vmem_estimate(bb, T, F, K) > vmem_budget:
        bb -= 1
        while B % bb:
            bb -= 1
    return bb


def local_transformer(x, params, *, batch_block=None):
    """x: (B, T, F) f32.  Returns (B, F, T) f32 (matches LocalTransformer.forward)."""
    B, T, F = x.shape
    K = params["wd1"].shape[0]
    assert K % 2 == 1, "depthwise kernel size must be odd ('same' padding assumes odd K)"
    H2, H3 = 2 * F, 3 * F

    vmem_limit = _vmem_limit_bytes()
    bb = batch_block if batch_block is not None else _pick_batch_block(B, T, F, K, vmem_limit)
    assert B % bb == 0, (B, bb)

    f32, bf16 = jnp.float32, jnp.bfloat16
    eps = 1e-5

    # ---- host-side constant folding: BN -> w2/b2, LayerScale -> w3/b3 & wg2/bg2 ----
    s = params["bn_g"] * jax.lax.rsqrt(params["bn_rv"] + eps)          # (1, 2F)
    w2_f = params["w2"] * s
    b2_f = (params["b2"] - params["bn_rm"]) * s + params["bn_b"]
    w3_f = params["w3"] * params["ls1"]
    b3_f = params["b3"] * params["ls1"]
    wg2_f = params["wg2"] * params["ls2"]
    bg2_f = params["bg2"] * params["ls2"]

    # ---- GLU weight splits (value / gate halves) ----
    w1_val, w1_gate = params["w1"][:, :F], params["w1"][:, F:]
    b1_val, b1_gate = params["b1"][:, :F], params["b1"][:, F:]
    wg1_val, wg1_gate = params["wg1"][:, :H3], params["wg1"][:, H3:]
    bg1_val, bg1_gate = params["bg1"][:, :H3], params["bg1"][:, H3:]
    wdg_val, wdg_gate = params["wdg"][:, :H3], params["wdg"][:, H3:]
    bdg_val, bdg_gate = params["bdg"][:, :H3], params["bdg"][:, H3:]

    # ---- pack all small vectors + depthwise taps into one (NR, 3F) f32 array ----
    def row(v):  # (1, w) -> (1, 3F), zero padded on the lane axis
        return jnp.pad(v.astype(f32), ((0, 0), (0, H3 - v.shape[1])))

    named = {
        "ln1_g": params["ln1_g"], "ln1_b": params["ln1_b"],
        "b1_val": b1_val, "b1_gate": b1_gate,
        "bd1": params["bd1"],
        "b2": b2_f,
        "b3": b3_f,
        "ln2_g": params["ln2_g"], "ln2_b": params["ln2_b"],
        "bg1_val": bg1_val, "bg1_gate": bg1_gate,
        "bdg_val": bdg_val, "bdg_gate": bdg_gate,
        "bg2": bg2_f,
    }
    rows = [row(named[name]) for name in _VEC_ROWS]
    rows += [row(params["wd1"][k:k + 1, :]) for k in range(K)]
    rows += [row(wdg_val[k:k + 1, :]) for k in range(3)]
    rows += [row(wdg_gate[k:k + 1, :]) for k in range(3)]
    pv = jnp.concatenate(rows, axis=0)                                 # (14 + K + 6, 3F)

    # ---- matmul weights in bf16 (f32 accumulation inside the kernel) ----
    w1v_b, w1g_b = w1_val.astype(bf16), w1_gate.astype(bf16)
    w2_b, w3_b = w2_f.astype(bf16), w3_f.astype(bf16)
    wg1v_b, wg1g_b = wg1_val.astype(bf16), wg1_gate.astype(bf16)
    wg2_b = wg2_f.astype(bf16)

    kernel = _make_kernel(bb, T, F, K)
    const2d = lambda i: (0, 0)   # constant-index (never re-fetched) weight blocks
    # NOTE: pipeline_mode=pl.Buffered(1) on the constant blocks and a lane-dense
    # (bb, T*F) output slab for F < 128 were evaluated but not applied here to
    # keep the lowering path identical to the known-good one.

    out_tf = pl.pallas_call(
        kernel,
        out_shape=jax.ShapeDtypeStruct((B, T, F), f32),
        grid_spec=pltpu.PrefetchScalarGridSpec(
            num_scalar_prefetch=0,
            grid=(B // bb,),
            in_specs=[
                pl.BlockSpec((bb, T, F), lambda i: (i, 0, 0)),   # x
                pl.BlockSpec((F, F), const2d),                   # w1 value half (bf16)
                pl.BlockSpec((F, F), const2d),                   # w1 gate half  (bf16)
                pl.BlockSpec((F, H2), const2d),                  # w2 (BN folded, bf16)
                pl.BlockSpec((H2, F), const2d),                  # w3 (ls1 folded, bf16)
                pl.BlockSpec((F, H3), const2d),                  # wg1 value half (bf16)
                pl.BlockSpec((F, H3), const2d),                  # wg1 gate half  (bf16)
                pl.BlockSpec((H3, F), const2d),                  # wg2 (ls2 folded, bf16)
                pl.BlockSpec(pv.shape, const2d),                 # packed vectors / taps (f32)
            ],
            out_specs=pl.BlockSpec((bb, T, F), lambda i: (i, 0, 0)),
            scratch_shapes=[
                pltpu.VMEM((bb, T + K - 1, F), f32),   # CLA depthwise-conv pad buffer
                pltpu.VMEM((bb, T + 2, H3), f32),      # GCFN conv pad buffer (shared value/gate)
            ],
        ),
        compiler_params=pltpu.CompilerParams(
            dimension_semantics=("parallel",),
            vmem_limit_bytes=vmem_limit,
        ),
    )(x.astype(f32), w1v_b, w1g_b, w2_b, w3_b, wg1v_b, wg1g_b, wg2_b, pv)

    # Final transpose(1, 2) kept outside the kernel (lane-dense stores inside).
    return jnp.transpose(out_tf, (0, 2, 1))


# ------------------------- deterministic parameter init ----------------------

def init_params(key, F, K, scale_init=1e-5):
    H2, H3, H6 = 2 * F, 3 * F, 6 * F
    ks = iter(jax.random.split(key, 32))

    def n(shape, s=0.1):
        return jax.random.normal(next(ks), shape, jnp.float32) * s

    return {
        "ln1_g": 1.0 + n((1, F), 0.1),
        "ln1_b": n((1, F), 0.05),
        # CLA
        "w1": n((F, H2)),          # pconv1 Linear(F, 2F) (GLU applied after)
        "b1": n((1, H2), 0.05),
        "wd1": n((K, F)),          # depthwise conv (K taps, F channels)
        "bd1": n((1, F), 0.05),
        "w2": n((F, H2)),          # pconv2 Linear(F, 2F)
        "b2": n((1, H2), 0.05),
        "bn_g": 1.0 + n((1, H2), 0.1),
        "bn_b": n((1, H2), 0.05),
        "bn_rm": n((1, H2), 0.1),
        "bn_rv": 1.0 + jnp.abs(n((1, H2), 0.2)),
        "w3": n((H2, F)),          # pconv3 Linear(2F, F)
        "b3": n((1, F), 0.05),
        "ls1": jnp.full((1, F), scale_init, jnp.float32),
        # LayerNorm 2
        "ln2_g": 1.0 + n((1, F), 0.1),
        "ln2_b": n((1, F), 0.05),
        # GCFN
        "wg1": n((F, H6)),         # pconv1 Linear(F, 6F)
        "bg1": n((1, H6), 0.05),
        "wdg": n((3, H6)),         # depthwise conv (3 taps, 6F channels)
        "bdg": n((1, H6), 0.05),
        "wg2": n((H3, F)),         # pconv2 Linear(3F, F)
        "bg2": n((1, F), 0.05),
        "ls2": jnp.full((1, F), scale_init, jnp.float32),
    }


# ------------------------------- pure-JAX reference --------------------------

def reference(x, p):
    def ln(v, g, b):
        mu = jnp.mean(v, -1, keepdims=True)
        var = jnp.mean((v - mu) ** 2, -1, keepdims=True)
        return (v - mu) / jnp.sqrt(var + 1e-5) * g + b

    def dw(v, w, b):  # v (B,T,C), w (K,C), b (1,C)
        K = w.shape[0]
        pad = (K - 1) // 2
        T = v.shape[1]
        vp = jnp.pad(v, ((0, 0), (pad, pad), (0, 0)))
        out = sum(vp[:, k:k + T, :] * w[k][None, None, :] for k in range(K))
        return out + b[None]

    def glu(v):
        h = v.shape[-1] // 2
        return v[..., :h] * jax.nn.sigmoid(v[..., h:])

    x_norm = ln(x, p["ln1_g"], p["ln1_b"])
    h = x_norm @ p["w1"] + p["b1"]
    h = glu(h)
    h = dw(h, p["wd1"], p["bd1"])
    h = h @ p["w2"] + p["b2"]
    h = (h - p["bn_rm"]) / jnp.sqrt(p["bn_rv"] + 1e-5) * p["bn_g"] + p["bn_b"]
    h = jax.nn.gelu(h, approximate=False)
    h = h @ p["w3"] + p["b3"]
    out1 = x_norm + h * p["ls1"] + x

    out_norm = ln(out1, p["ln2_g"], p["ln2_b"])
    g = out_norm @ p["wg1"] + p["bg1"]
    g = dw(g, p["wdg"], p["bdg"])
    g = glu(g)
    g = g @ p["wg2"] + p["bg2"]
    out2 = out_norm + g * p["ls2"] + out1
    return jnp.transpose(out2, (0, 2, 1))


# ----------------------------------- main -------------------------------------

if __name__ == "__main__":
    B, T, F, K = 2, 16, 32, 5  # batch, seq, channels, CLA kernel size (odd)

    key = jax.random.PRNGKey(0)
    kx, kp = jax.random.split(key)
    x = jax.random.normal(kx, (B, T, F), jnp.float32)
    params = init_params(kp, F, K)

    out = jax.block_until_ready(jax.jit(local_transformer)(x, params))
    assert out.shape == (B, F, T), out.shape

    ref = jax.block_until_ready(reference(x, params))
    diff = np.max(np.abs(np.asarray(out) - np.asarray(ref)))
    if not np.allclose(np.asarray(out), np.asarray(ref), atol=1e-3, rtol=1e-3):
        raise AssertionError(f"mismatch: max abs diff {diff}")

    print("KERNEL_OK")
</pallas_src>

<mosaic_0001>
module attributes {stable_mosaic.version = 11 : i64} {
  func.func @kernel(%arg0: i32, %arg1: memref<1x16x32xf32, #tpu.memory_space<vmem>>, %arg2: memref<32x32xbf16, #tpu.memory_space<vmem>>, %arg3: memref<32x32xbf16, #tpu.memory_space<vmem>>, %arg4: memref<32x64xbf16, #tpu.memory_space<vmem>>, %arg5: memref<64x32xbf16, #tpu.memory_space<vmem>>, %arg6: memref<32x96xbf16, #tpu.memory_space<vmem>>, %arg7: memref<32x96xbf16, #tpu.memory_space<vmem>>, %arg8: memref<96x32xbf16, #tpu.memory_space<vmem>>, %arg9: memref<25x96xf32, #tpu.memory_space<vmem>>, %arg10: memref<1x16x32xf32, #tpu.memory_space<vmem>>, %arg11: memref<1x20x32xf32, #tpu.memory_space<vmem>>, %arg12: memref<1x18x96xf32, #tpu.memory_space<vmem>>) attributes {dimension_semantics = [#tpu.dimension_semantics<parallel>], iteration_bounds = array<i64: 2>, scalar_prefetch = 0 : i64, scratch_operands = 2 : i64, tpu.core_type = #tpu.core_type<tc>, window_params = [{transform_indices = @transform_0, window_bounds = array<i64: 1, 16, 32>}, {pipeline_mode = #tpu.pipeline_mode<synchronous>, transform_indices = @transform_1, window_bounds = array<i64: 32, 32>}, {pipeline_mode = #tpu.pipeline_mode<synchronous>, transform_indices = @transform_2, window_bounds = array<i64: 32, 32>}, {pipeline_mode = #tpu.pipeline_mode<synchronous>, transform_indices = @transform_3, window_bounds = array<i64: 32, 64>}, {pipeline_mode = #tpu.pipeline_mode<synchronous>, transform_indices = @transform_4, window_bounds = array<i64: 64, 32>}, {pipeline_mode = #tpu.pipeline_mode<synchronous>, transform_indices = @transform_5, window_bounds = array<i64: 32, 96>}, {pipeline_mode = #tpu.pipeline_mode<synchronous>, transform_indices = @transform_6, window_bounds = array<i64: 32, 96>}, {pipeline_mode = #tpu.pipeline_mode<synchronous>, transform_indices = @transform_7, window_bounds = array<i64: 96, 32>}, {pipeline_mode = #tpu.pipeline_mode<synchronous>, transform_indices = @transform_8, window_bounds = array<i64: 25, 96>}, {transform_indices = @transform_9, window_bounds = array<i64: 1, 16, 32>}]} {
    %c0 = arith.constant 0 : index
    %c0_0 = arith.constant 0 : index
    %c0_1 = arith.constant 0 : index
    %0 = vector.load %arg1[%c0, %c0_0, %c0_1] : memref<1x16x32xf32, #tpu.memory_space<vmem>>, vector<1x16x32xf32>
    %1 = vector.shape_cast %0 : vector<1x16x32xf32> to vector<16x32xf32>
    %c0_2 = arith.constant 0 : index
    %c0_3 = arith.constant 0 : index
    %2 = vector.load %arg9[%c0_2, %c0_3] : memref<25x96xf32, #tpu.memory_space<vmem>>, vector<1x32xf32>
    %c1 = arith.constant 1 : index
    %c0_4 = arith.constant 0 : index
    %3 = vector.load %arg9[%c1, %c0_4] : memref<25x96xf32, #tpu.memory_space<vmem>>, vector<1x32xf32>
    %cst = arith.constant dense<0.000000e+00> : vector<16xf32>
    %4 = vector.multi_reduction <add>, %1, %cst [1] : vector<16x32xf32> to vector<16xf32>
    %5 = vector.shape_cast %4 : vector<16xf32> to vector<16x1xf32>
    %cst_5 = arith.constant 3.200000e+01 : f32
    %6 = vector.broadcast %cst_5 : f32 to vector<16x1xf32>
    %7 = arith.divf %5, %6 : vector<16x1xf32>
    %8 = arith.mulf %1, %1 : vector<16x32xf32>
    %cst_6 = arith.constant dense<0.000000e+00> : vector<16xf32>
    %9 = vector.multi_reduction <add>, %8, %cst_6 [1] : vector<16x32xf32> to vector<16xf32>
    %10 = vector.shape_cast %9 : vector<16xf32> to vector<16x1xf32>
    %cst_7 = arith.constant 3.200000e+01 : f32
    %11 = vector.broadcast %cst_7 : f32 to vector<16x1xf32>
    %12 = arith.divf %10, %11 : vector<16x1xf32>
    %13 = arith.mulf %7, %7 : vector<16x1xf32>
    %14 = arith.subf %12, %13 : vector<16x1xf32>
    %15 = vector.broadcast %7 : vector<16x1xf32> to vector<16x32xf32>
    %16 = arith.subf %1, %15 : vector<16x32xf32>
    %cst_8 = arith.constant 9.99999974E-6 : f32
    %17 = vector.broadcast %cst_8 : f32 to vector<16x1xf32>
    %18 = arith.addf %14, %17 : vector<16x1xf32>
    %19 = math.rsqrt %18 : vector<16x1xf32>
    %20 = vector.broadcast %19 : vector<16x1xf32> to vector<16x32xf32>
    %21 = arith.mulf %16, %20 : vector<16x32xf32>
    %22 = vector.broadcast %2 : vector<1x32xf32> to vector<16x32xf32>
    %23 = arith.mulf %21, %22 : vector<16x32xf32>
    %24 = vector.broadcast %3 : vector<1x32xf32> to vector<16x32xf32>
    %25 = arith.addf %23, %24 : vector<16x32xf32>
    %26 = arith.truncf %25 : vector<16x32xf32> to vector<16x32xbf16>
    %c0_9 = arith.constant 0 : index
    %c0_10 = arith.constant 0 : index
    %27 = vector.load %arg2[%c0_9, %c0_10] : memref<32x32xbf16, #tpu.memory_space<vmem>>, vector<32x32xbf16>
    %cst_11 = arith.constant dense<0.000000e+00> : vector<16x32xf32>
    %28 = tpu.matmul %26, %27, %cst_11 {dimension_numbers = #tpu.dot_dimension_numbers<[1], [0], [0], [1], [0, 0, 1, 1], [], []>} : vector<16x32xbf16>, vector<32x32xbf16>, vector<16x32xf32> -> vector<16x32xf32>
    %c2 = arith.constant 2 : index
    %c0_12 = arith.constant 0 : index
    %29 = vector.load %arg9[%c2, %c0_12] : memref<25x96xf32, #tpu.memory_space<vmem>>, vector<1x32xf32>
    %30 = vector.broadcast %29 : vector<1x32xf32> to vector<16x32xf32>
    %31 = arith.addf %28, %30 : vector<16x32xf32>
    %c0_13 = arith.constant 0 : index
    %c0_14 = arith.constant 0 : index
    %32 = vector.load %arg3[%c0_13, %c0_14] : memref<32x32xbf16, #tpu.memory_space<vmem>>, vector<32x32xbf16>
    %cst_15 = arith.constant dense<0.000000e+00> : vector<16x32xf32>
    %33 = tpu.matmul %26, %32, %cst_15 {dimension_numbers = #tpu.dot_dimension_numbers<[1], [0], [0], [1], [0, 0, 1, 1], [], []>} : vector<16x32xbf16>, vector<32x32xbf16>, vector<16x32xf32> -> vector<16x32xf32>
    %c3 = arith.constant 3 : index
    %c0_16 = arith.constant 0 : index
    %34 = vector.load %arg9[%c3, %c0_16] : memref<25x96xf32, #tpu.memory_space<vmem>>, vector<1x32xf32>
    %35 = vector.broadcast %34 : vector<1x32xf32> to vector<16x32xf32>
    %36 = arith.addf %33, %35 : vector<16x32xf32>
    %37 = arith.negf %36 : vector<16x32xf32>
    %38 = math.exp %37 : vector<16x32xf32>
    %cst_17 = arith.constant 1.000000e+00 : f32
    %39 = vector.broadcast %cst_17 : f32 to vector<16x32xf32>
    %40 = arith.addf %39, %38 : vector<16x32xf32>
    %41 = arith.divf %39, %40 : vector<16x32xf32>
    %42 = arith.mulf %31, %41 : vector<16x32xf32>
    %43 = vector.shape_cast %42 : vector<16x32xf32> to vector<1x16x32xf32>
    %cst_18 = arith.constant 0.000000e+00 : f32
    %44 = vector.broadcast %cst_18 : f32 to vector<1x2x32xf32>
    %c0_19 = arith.constant 0 : index
    %c0_20 = arith.constant 0 : index
    %c0_21 = arith.constant 0 : index
    %45 = vector.load %arg11[%c0_19, %c0_20, %c0_21] : memref<1x20x32xf32, #tpu.memory_space<vmem>>, vector<1x2x32xf32>
    tpu.vector_store %arg11[%c0_19, %c0_20, %c0_21], %44 {strides = array<i32>} : memref<1x20x32xf32, #tpu.memory_space<vmem>>, vector<1x2x32xf32>,
    %c0_22 = arith.constant 0 : index
    %c18 = arith.constant 18 : index
    %c0_23 = arith.constant 0 : index
    %46 = vector.load %arg11[%c0_22, %c18, %c0_23] : memref<1x20x32xf32, #tpu.memory_space<vmem>>, vector<1x2x32xf32>
    tpu.vector_store %arg11[%c0_22, %c18, %c0_23], %44 {strides = array<i32>} : memref<1x20x32xf32, #tpu.memory_space<vmem>>, vector<1x2x32xf32>,
    %c0_24 = arith.constant 0 : index
    %c2_25 = arith.constant 2 : index
    %c0_26 = arith.constant 0 : index
    %47 = vector.load %arg11[%c0_24, %c2_25, %c0_26] : memref<1x20x32xf32, #tpu.memory_space<vmem>>, vector<1x16x32xf32>
    tpu.vector_store %arg11[%c0_24, %c2_25, %c0_26], %43 {strides = array<i32>} : memref<1x20x32xf32, #tpu.memory_space<vmem>>, vector<1x16x32xf32>,
    %c14 = arith.constant 14 : index
    %c0_27 = arith.constant 0 : index
    %48 = vector.load %arg9[%c14, %c0_27] : memref<25x96xf32, #tpu.memory_space<vmem>>, vector<1x32xf32>
    %c0_28 = arith.constant 0 : index
    %c0_29 = arith.constant 0 : index
    %c0_30 = arith.constant 0 : index
    %49 = vector.load %arg11[%c0_28, %c0_29, %c0_30] : memref<1x20x32xf32, #tpu.memory_space<vmem>>, vector<1x16x32xf32>
    %50 = vector.shape_cast %48 : vector<1x32xf32> to vector<1x1x32xf32>
    %51 = vector.broadcast %50 : vector<1x1x32xf32> to vector<1x16x32xf32>
    %52 = arith.mulf %51, %49 : vector<1x16x32xf32>
    %c15 = arith.constant 15 : index
    %c0_31 = arith.constant 0 : index
    %53 = vector.load %arg9[%c15, %c0_31] : memref<25x96xf32, #tpu.memory_space<vmem>>, vector<1x32xf32>
    %c0_32 = arith.constant 0 : index
    %c1_33 = arith.constant 1 : index
    %c0_34 = arith.constant 0 : index
    %54 = vector.load %arg11[%c0_32, %c1_33, %c0_34] : memref<1x20x32xf32, #tpu.memory_space<vmem>>, vector<1x16x32xf32>
    %55 = vector.shape_cast %53 : vector<1x32xf32> to vector<1x1x32xf32>
    %56 = vector.broadcast %55 : vector<1x1x32xf32> to vector<1x16x32xf32>
    %57 = arith.mulf %56, %54 : vector<1x16x32xf32>
    %58 = arith.addf %52, %57 : vector<1x16x32xf32>
    %c16 = arith.constant 16 : index
    %c0_35 = arith.constant 0 : index
    %59 = vector.load %arg9[%c16, %c0_35] : memref<25x96xf32, #tpu.memory_space<vmem>>, vector<1x32xf32>
    %c0_36 = arith.constant 0 : index
    %c2_37 = arith.constant 2 : index
    %c0_38 = arith.constant 0 : index
    %60 = vector.load %arg11[%c0_36, %c2_37, %c0_38] : memref<1x20x32xf32, #tpu.memory_space<vmem>>, vector<1x16x32xf32>
    %61 = vector.shape_cast %59 : vector<1x32xf32> to vector<1x1x32xf32>
    %62 = vector.broadcast %61 : vector<1x1x32xf32> to vector<1x16x32xf32>
    %63 = arith.mulf %62, %60 : vector<1x16x32xf32>
    %64 = arith.addf %58, %63 : vector<1x16x32xf32>
    %c17 = arith.constant 17 : index
    %c0_39 = arith.constant 0 : index
    %65 = vector.load %arg9[%c17, %c0_39] : memref<25x96xf32, #tpu.memory_space<vmem>>, vector<1x32xf32>
    %c0_40 = arith.constant 0 : index
    %c3_41 = arith.constant 3 : index
    %c0_42 = arith.constant 0 : index
    %66 = vector.load %arg11[%c0_40, %c3_41, %c0_42] : memref<1x20x32xf32, #tpu.memory_space<vmem>>, vector<1x16x32xf32>
    %67 = vector.shape_cast %65 : vector<1x32xf32> to vector<1x1x32xf32>
    %68 = vector.broadcast %67 : vector<1x1x32xf32> to vector<1x16x32xf32>
    %69 = arith.mulf %68, %66 : vector<1x16x32xf32>
    %70 = arith.addf %64, %69 : vector<1x16x32xf32>
    %c18_43 = arith.constant 18 : index
    %c0_44 = arith.constant 0 : index
    %71 = vector.load %arg9[%c18_43, %c0_44] : memref<25x96xf32, #tpu.memory_space<vmem>>, vector<1x32xf32>
    %c0_45 = arith.constant 0 : index
    %c4 = arith.constant 4 : index
    %c0_46 = arith.constant 0 : index
    %72 = vector.load %arg11[%c0_45, %c4, %c0_46] : memref<1x20x32xf32, #tpu.memory_space<vmem>>, vector<1x16x32xf32>
    %73 = vector.shape_cast %71 : vector<1x32xf32> to vector<1x1x32xf32>
    %74 = vector.broadcast %73 : vector<1x1x32xf32> to vector<1x16x32xf32>
    %75 = arith.mulf %74, %72 : vector<1x16x32xf32>
    %76 = arith.addf %70, %75 : vector<1x16x32xf32>
    %c4_47 = arith.constant 4 : index
    %c0_48 = arith.constant 0 : index
    %77 = vector.load %arg9[%c4_47, %c0_48] : memref<25x96xf32, #tpu.memory_space<vmem>>, vector<1x32xf32>
    %78 = vector.shape_cast %77 : vector<1x32xf32> to vector<1x1x32xf32>
    %79 = vector.broadcast %78 : vector<1x1x32xf32> to vector<1x16x32xf32>
    %80 = arith.addf %76, %79 : vector<1x16x32xf32>
    %81 = vector.shape_cast %80 : vector<1x16x32xf32> to vector<16x32xf32>
    %82 = arith.truncf %81 : vector<16x32xf32> to vector<16x32xbf16>
    %c0_49 = arith.constant 0 : index
    %c0_50 = arith.constant 0 : index
    %83 = vector.load %arg4[%c0_49, %c0_50] : memref<32x64xbf16, #tpu.memory_space<vmem>>, vector<32x64xbf16>
    %cst_51 = arith.constant dense<0.000000e+00> : vector<16x64xf32>
    %84 = tpu.matmul %82, %83, %cst_51 {dimension_numbers = #tpu.dot_dimension_numbers<[1], [0], [0], [1], [0, 0, 1, 1], [], []>} : vector<16x32xbf16>, vector<32x64xbf16>, vector<16x64xf32> -> vector<16x64xf32>
    %c5 = arith.constant 5 : index
    %c0_52 = arith.constant 0 : index
    %85 = vector.load %arg9[%c5, %c0_52] : memref<25x96xf32, #tpu.memory_space<vmem>>, vector<1x64xf32>
    %86 = vector.broadcast %85 : vector<1x64xf32> to vector<16x64xf32>
    %87 = arith.addf %84, %86 : vector<16x64xf32>
    %cst_53 = arith.constant 5.000000e-01 : f32
    %88 = vector.broadcast %cst_53 : f32 to vector<16x64xf32>
    %89 = arith.mulf %88, %87 : vector<16x64xf32>
    %cst_54 = arith.constant 0.707106769 : f32
    %90 = vector.broadcast %cst_54 : f32 to vector<16x64xf32>
    %91 = arith.mulf %87, %90 : vector<16x64xf32>
    %92 = math.absf %91 : vector<16x64xf32>
    %cst_55 = arith.constant 0.327591091 : f32
    %93 = vector.broadcast %cst_55 : f32 to vector<16x64xf32>
    %94 = arith.mulf %93, %92 : vector<16x64xf32>
    %cst_56 = arith.constant 1.000000e+00 : f32
    %95 = vector.broadcast %cst_56 : f32 to vector<16x64xf32>
    %96 = arith.addf %95, %94 : vector<16x64xf32>
    %97 = tpu.reciprocal %96 {approx = true} : vector<16x64xf32> -> vector<16x64xf32>
    %cst_57 = arith.constant 1.06140542 : f32
    %98 = vector.broadcast %cst_57 : f32 to vector<16x64xf32>
    %99 = arith.mulf %98, %97 : vector<16x64xf32>
    %cst_58 = arith.constant -1.45315206 : f32
    %100 = vector.broadcast %cst_58 : f32 to vector<16x64xf32>
    %101 = arith.addf %99, %100 : vector<16x64xf32>
    %102 = arith.mulf %101, %97 : vector<16x64xf32>
    %cst_59 = arith.constant 1.42141378 : f32
    %103 = vector.broadcast %cst_59 : f32 to vector<16x64xf32>
    %104 = arith.addf %102, %103 : vector<16x64xf32>
    %105 = arith.mulf %104, %97 : vector<16x64xf32>
    %cst_60 = arith.constant -0.284496725 : f32
    %106 = vector.broadcast %cst_60 : f32 to vector<16x64xf32>
    %107 = arith.addf %105, %106 : vector<16x64xf32>
    %108 = arith.mulf %107, %97 : vector<16x64xf32>
    %cst_61 = arith.constant 0.254829586 : f32
    %109 = vector.broadcast %cst_61 : f32 to vector<16x64xf32>
    %110 = arith.addf %108, %109 : vector<16x64xf32>
    %111 = arith.mulf %110, %97 : vector<16x64xf32>
    %cst_62 = arith.constant 0.000000e+00 : f32
    %112 = vector.broadcast %cst_62 : f32 to vector<16x64xf32>
    %113 = arith.subf %112, %92 : vector<16x64xf32>
    %114 = arith.mulf %113, %92 : vector<16x64xf32>
    %115 = math.exp %114 : vector<16x64xf32>
    %116 = arith.mulf %111, %115 : vector<16x64xf32>
    %cst_63 = arith.constant 1.000000e+00 : f32
    %117 = vector.broadcast %cst_63 : f32 to vector<16x64xf32>
    %118 = arith.subf %117, %116 : vector<16x64xf32>
    %cst_64 = arith.constant 0.000000e+00 : f32
    %119 = vector.broadcast %cst_64 : f32 to vector<16x64xf32>
    %120 = arith.cmpf oge, %91, %119 : vector<16x64xf32>
    %cst_65 = arith.constant 0.000000e+00 : f32
    %121 = vector.broadcast %cst_65 : f32 to vector<16x64xf32>
    %122 = arith.subf %121, %118 : vector<16x64xf32>
    %123 = arith.select %120, %118, %122 : vector<16x64xi1>, vector<16x64xf32>
    %cst_66 = arith.constant 1.000000e+00 : f32
    %124 = vector.broadcast %cst_66 : f32 to vector<16x64xf32>
    %125 = arith.addf %124, %123 : vector<16x64xf32>
    %126 = arith.mulf %89, %125 : vector<16x64xf32>
    %127 = arith.truncf %126 : vector<16x64xf32> to vector<16x64xbf16>
    %c0_67 = arith.constant 0 : index
    %c0_68 = arith.constant 0 : index
    %128 = vector.load %arg5[%c0_67, %c0_68] : memref<64x32xbf16, #tpu.memory_space<vmem>>, vector<64x32xbf16>
    %cst_69 = arith.constant dense<0.000000e+00> : vector<16x32xf32>
    %129 = tpu.matmul %127, %128, %cst_69 {dimension_numbers = #tpu.dot_dimension_numbers<[1], [0], [0], [1], [0, 0, 1, 1], [], []>} : vector<16x64xbf16>, vector<64x32xbf16>, vector<16x32xf32> -> vector<16x32xf32>
    %c6 = arith.constant 6 : index
    %c0_70 = arith.constant 0 : index
    %130 = vector.load %arg9[%c6, %c0_70] : memref<25x96xf32, #tpu.memory_space<vmem>>, vector<1x32xf32>
    %131 = vector.broadcast %130 : vector<1x32xf32> to vector<16x32xf32>
    %132 = arith.addf %129, %131 : vector<16x32xf32>
    %133 = arith.addf %25, %132 : vector<16x32xf32>
    %134 = arith.addf %133, %1 : vector<16x32xf32>
    %c7 = arith.constant 7 : index
    %c0_71 = arith.constant 0 : index
    %135 = vector.load %arg9[%c7, %c0_71] : memref<25x96xf32, #tpu.memory_space<vmem>>, vector<1x32xf32>
    %c8 = arith.constant 8 : index
    %c0_72 = arith.constant 0 : index
    %136 = vector.load %arg9[%c8, %c0_72] : memref<25x96xf32, #tpu.memory_space<vmem>>, vector<1x32xf32>
    %cst_73 = arith.constant dense<0.000000e+00> : vector<16xf32>
    %137 = vector.multi_reduction <add>, %134, %cst_73 [1] : vector<16x32xf32> to vector<16xf32>
    %138 = vector.shape_cast %137 : vector<16xf32> to vector<16x1xf32>
    %cst_74 = arith.constant 3.200000e+01 : f32
    %139 = vector.broadcast %cst_74 : f32 to vector<16x1xf32>
    %140 = arith.divf %138, %139 : vector<16x1xf32>
    %141 = arith.mulf %134, %134 : vector<16x32xf32>
    %cst_75 = arith.constant dense<0.000000e+00> : vector<16xf32>
    %142 = vector.multi_reduction <add>, %141, %cst_75 [1] : vector<16x32xf32> to vector<16xf32>
    %143 = vector.shape_cast %142 : vector<16xf32> to vector<16x1xf32>
    %cst_76 = arith.constant 3.200000e+01 : f32
    %144 = vector.broadcast %cst_76 : f32 to vector<16x1xf32>
    %145 = arith.divf %143, %144 : vector<16x1xf32>
    %146 = arith.mulf %140, %140 : vector<16x1xf32>
    %147 = arith.subf %145, %146 : vector<16x1xf32>
    %148 = vector.broadcast %140 : vector<16x1xf32> to vector<16x32xf32>
    %149 = arith.subf %134, %148 : vector<16x32xf32>
    %cst_77 = arith.constant 9.99999974E-6 : f32
    %150 = vector.broadcast %cst_77 : f32 to vector<16x1xf32>
    %151 = arith.addf %147, %150 : vector<16x1xf32>
    %152 = math.rsqrt %151 : vector<16x1xf32>
    %153 = vector.broadcast %152 : vector<16x1xf32> to vector<16x32xf32>
    %154 = arith.mulf %149, %153 : vector<16x32xf32>
    %155 = vector.broadcast %135 : vector<1x32xf32> to vector<16x32xf32>
    %156 = arith.mulf %154, %155 : vector<16x32xf32>
    %157 = vector.broadcast %136 : vector<1x32xf32> to vector<16x32xf32>
    %158 = arith.addf %156, %157 : vector<16x32xf32>
    %159 = arith.truncf %158 : vector<16x32xf32> to vector<16x32xbf16>
    %c0_78 = arith.constant 0 : index
    %c0_79 = arith.constant 0 : index
    %160 = vector.load %arg6[%c0_78, %c0_79] : memref<32x96xbf16, #tpu.memory_space<vmem>>, vector<32x96xbf16>
    %cst_80 = arith.constant dense<0.000000e+00> : vector<16x96xf32>
    %161 = tpu.matmul %159, %160, %cst_80 {dimension_numbers = #tpu.dot_dimension_numbers<[1], [0], [0], [1], [0, 0, 1, 1], [], []>} : vector<16x32xbf16>, vector<32x96xbf16>, vector<16x96xf32> -> vector<16x96xf32>
    %c9 = arith.constant 9 : index
    %c0_81 = arith.constant 0 : index
    %162 = vector.load %arg9[%c9, %c0_81] : memref<25x96xf32, #tpu.memory_space<vmem>>, vector<1x96xf32>
    %163 = vector.broadcast %162 : vector<1x96xf32> to vector<16x96xf32>
    %164 = arith.addf %161, %163 : vector<16x96xf32>
    %c0_82 = arith.constant 0 : index
    %c0_83 = arith.constant 0 : index
    %165 = vector.load %arg7[%c0_82, %c0_83] : memref<32x96xbf16, #tpu.memory_space<vmem>>, vector<32x96xbf16>
    %cst_84 = arith.constant dense<0.000000e+00> : vector<16x96xf32>
    %166 = tpu.matmul %159, %165, %cst_84 {dimension_numbers = #tpu.dot_dimension_numbers<[1], [0], [0], [1], [0, 0, 1, 1], [], []>} : vector<16x32xbf16>, vector<32x96xbf16>, vector<16x96xf32> -> vector<16x96xf32>
    %c10 = arith.constant 10 : index
    %c0_85 = arith.constant 0 : index
    %167 = vector.load %arg9[%c10, %c0_85] : memref<25x96xf32, #tpu.memory_space<vmem>>, vector<1x96xf32>
    %168 = vector.broadcast %167 : vector<1x96xf32> to vector<16x96xf32>
    %169 = arith.addf %166, %168 : vector<16x96xf32>
    %170 = vector.shape_cast %164 : vector<16x96xf32> to vector<1x16x96xf32>
    %cst_86 = arith.constant 0.000000e+00 : f32
    %171 = vector.broadcast %cst_86 : f32 to vector<1x1x96xf32>
    %c0_87 = arith.constant 0 : index
    %c0_88 = arith.constant 0 : index
    %c0_89 = arith.constant 0 : index
    %172 = vector.load %arg12[%c0_87, %c0_88, %c0_89] : memref<1x18x96xf32, #tpu.memory_space<vmem>>, vector<1x1x96xf32>
    tpu.vector_store %arg12[%c0_87, %c0_88, %c0_89], %171 {strides = array<i32>} : memref<1x18x96xf32, #tpu.memory_space<vmem>>, vector<1x1x96xf32>,
    %c0_90 = arith.constant 0 : index
    %c17_91 = arith.constant 17 : index
    %c0_92 = arith.constant 0 : index
    %173 = vector.load %arg12[%c0_90, %c17_91, %c0_92] : memref<1x18x96xf32, #tpu.memory_space<vmem>>, vector<1x1x96xf32>
    tpu.vector_store %arg12[%c0_90, %c17_91, %c0_92], %171 {strides = array<i32>} : memref<1x18x96xf32, #tpu.memory_space<vmem>>, vector<1x1x96xf32>,
    %c0_93 = arith.constant 0 : index
    %c1_94 = arith.constant 1 : index
    %c0_95 = arith.constant 0 : index
    %174 = vector.load %arg12[%c0_93, %c1_94, %c0_95] : memref<1x18x96xf32, #tpu.memory_space<vmem>>, vector<1x16x96xf32>
    tpu.vector_store %arg12[%c0_93, %c1_94, %c0_95], %170 {strides = array<i32>} : memref<1x18x96xf32, #tpu.memory_space<vmem>>, vector<1x16x96xf32>,
    %c19 = arith.constant 19 : index
    %c0_96 = arith.constant 0 : index
    %175 = vector.load %arg9[%c19, %c0_96] : memref<25x96xf32, #tpu.memory_space<vmem>>, vector<1x96xf32>
    %c0_97 = arith.constant 0 : index
    %c0_98 = arith.constant 0 : index
    %c0_99 = arith.constant 0 : index
    %176 = vector.load %arg12[%c0_97, %c0_98, %c0_99] : memref<1x18x96xf32, #tpu.memory_space<vmem>>, vector<1x16x96xf32>
    %177 = vector.shape_cast %175 : vector<1x96xf32> to vector<1x1x96xf32>
    %178 = vector.broadcast %177 : vector<1x1x96xf32> to vector<1x16x96xf32>
    %179 = arith.mulf %178, %176 : vector<1x16x96xf32>
    %c20 = arith.constant 20 : index
    %c0_100 = arith.constant 0 : index
    %180 = vector.load %arg9[%c20, %c0_100] : memref<25x96xf32, #tpu.memory_space<vmem>>, vector<1x96xf32>
    %c0_101 = arith.constant 0 : index
    %c1_102 = arith.constant 1 : index
    %c0_103 = arith.constant 0 : index
    %181 = vector.load %arg12[%c0_101, %c1_102, %c0_103] : memref<1x18x96xf32, #tpu.memory_space<vmem>>, vector<1x16x96xf32>
    %182 = vector.shape_cast %180 : vector<1x96xf32> to vector<1x1x96xf32>
    %183 = vector.broadcast %182 : vector<1x1x96xf32> to vector<1x16x96xf32>
    %184 = arith.mulf %183, %181 : vector<1x16x96xf32>
    %185 = arith.addf %179, %184 : vector<1x16x96xf32>
    %c21 = arith.constant 21 : index
    %c0_104 = arith.constant 0 : index
    %186 = vector.load %arg9[%c21, %c0_104] : memref<25x96xf32, #tpu.memory_space<vmem>>, vector<1x96xf32>
    %c0_105 = arith.constant 0 : index
    %c2_106 = arith.constant 2 : index
    %c0_107 = arith.constant 0 : index
    %187 = vector.load %arg12[%c0_105, %c2_106, %c0_107] : memref<1x18x96xf32, #tpu.memory_space<vmem>>, vector<1x16x96xf32>
    %188 = vector.shape_cast %186 : vector<1x96xf32> to vector<1x1x96xf32>
    %189 = vector.broadcast %188 : vector<1x1x96xf32> to vector<1x16x96xf32>
    %190 = arith.mulf %189, %187 : vector<1x16x96xf32>
    %191 = arith.addf %185, %190 : vector<1x16x96xf32>
    %c11 = arith.constant 11 : index
    %c0_108 = arith.constant 0 : index
    %192 = vector.load %arg9[%c11, %c0_108] : memref<25x96xf32, #tpu.memory_space<vmem>>, vector<1x96xf32>
    %193 = vector.shape_cast %192 : vector<1x96xf32> to vector<1x1x96xf32>
    %194 = vector.broadcast %193 : vector<1x1x96xf32> to vector<1x16x96xf32>
    %195 = arith.addf %191, %194 : vector<1x16x96xf32>
    %196 = vector.shape_cast %169 : vector<16x96xf32> to vector<1x16x96xf32>
    %cst_109 = arith.constant 0.000000e+00 : f32
    %197 = vector.broadcast %cst_109 : f32 to vector<1x1x96xf32>
    %c0_110 = arith.constant 0 : index
    %c0_111 = arith.constant 0 : index
    %c0_112 = arith.constant 0 : index
    %198 = vector.load %arg12[%c0_110, %c0_111, %c0_112] : memref<1x18x96xf32, #tpu.memory_space<vmem>>, vector<1x1x96xf32>
    tpu.vector_store %arg12[%c0_110, %c0_111, %c0_112], %197 {strides = array<i32>} : memref<1x18x96xf32, #tpu.memory_space<vmem>>, vector<1x1x96xf32>,
    %c0_113 = arith.constant 0 : index
    %c17_114 = arith.constant 17 : index
    %c0_115 = arith.constant 0 : index
    %199 = vector.load %arg12[%c0_113, %c17_114, %c0_115] : memref<1x18x96xf32, #tpu.memory_space<vmem>>, vector<1x1x96xf32>
    tpu.vector_store %arg12[%c0_113, %c17_114, %c0_115], %197 {strides = array<i32>} : memref<1x18x96xf32, #tpu.memory_space<vmem>>, vector<1x1x96xf32>,
    %c0_116 = arith.constant 0 : index
    %c1_117 = arith.constant 1 : index
    %c0_118 = arith.constant 0 : index
    %200 = vector.load %arg12[%c0_116, %c1_117, %c0_118] : memref<1x18x96xf32, #tpu.memory_space<vmem>>, vector<1x16x96xf32>
    tpu.vector_store %arg12[%c0_116, %c1_117, %c0_118], %196 {strides = array<i32>} : memref<1x18x96xf32, #tpu.memory_space<vmem>>, vector<1x16x96xf32>,
    %c22 = arith.constant 22 : index
    %c0_119 = arith.constant 0 : index
    %201 = vector.load %arg9[%c22, %c0_119] : memref<25x96xf32, #tpu.memory_space<vmem>>, vector<1x96xf32>
    %c0_120 = arith.constant 0 : index
    %c0_121 = arith.constant 0 : index
    %c0_122 = arith.constant 0 : index
    %202 = vector.load %arg12[%c0_120, %c0_121, %c0_122] : memref<1x18x96xf32, #tpu.memory_space<vmem>>, vector<1x16x96xf32>
    %203 = vector.shape_cast %201 : vector<1x96xf32> to vector<1x1x96xf32>
    %204 = vector.broadcast %203 : vector<1x1x96xf32> to vector<1x16x96xf32>
    %205 = arith.mulf %204, %202 : vector<1x16x96xf32>
    %c23 = arith.constant 23 : index
    %c0_123 = arith.constant 0 : index
    %206 = vector.load %arg9[%c23, %c0_123] : memref<25x96xf32, #tpu.memory_space<vmem>>, vector<1x96xf32>
    %c0_124 = arith.constant 0 : index
    %c1_125 = arith.constant 1 : index
    %c0_126 = arith.constant 0 : index
    %207 = vector.load %arg12[%c0_124, %c1_125, %c0_126] : memref<1x18x96xf32, #tpu.memory_space<vmem>>, vector<1x16x96xf32>
    %208 = vector.shape_cast %206 : vector<1x96xf32> to vector<1x1x96xf32>
    %209 = vector.broadcast %208 : vector<1x1x96xf32> to vector<1x16x96xf32>
    %210 = arith.mulf %209, %207 : vector<1x16x96xf32>
    %211 = arith.addf %205, %210 : vector<1x16x96xf32>
    %c24 = arith.constant 24 : index
    %c0_127 = arith.constant 0 : index
    %212 = vector.load %arg9[%c24, %c0_127] : memref<25x96xf32, #tpu.memory_space<vmem>>, vector<1x96xf32>
    %c0_128 = arith.constant 0 : index
    %c2_129 = arith.constant 2 : index
    %c0_130 = arith.constant 0 : index
    %213 = vector.load %arg12[%c0_128, %c2_129, %c0_130] : memref<1x18x96xf32, #tpu.memory_space<vmem>>, vector<1x16x96xf32>
    %214 = vector.shape_cast %212 : vector<1x96xf32> to vector<1x1x96xf32>
    %215 = vector.broadcast %214 : vector<1x1x96xf32> to vector<1x16x96xf32>
    %216 = arith.mulf %215, %213 : vector<1x16x96xf32>
    %217 = arith.addf %211, %216 : vector<1x16x96xf32>
    %c12 = arith.constant 12 : index
    %c0_131 = arith.constant 0 : index
    %218 = vector.load %arg9[%c12, %c0_131] : memref<25x96xf32, #tpu.memory_space<vmem>>, vector<1x96xf32>
    %219 = vector.shape_cast %218 : vector<1x96xf32> to vector<1x1x96xf32>
    %220 = vector.broadcast %219 : vector<1x1x96xf32> to vector<1x16x96xf32>
    %221 = arith.addf %217, %220 : vector<1x16x96xf32>
    %222 = arith.negf %221 : vector<1x16x96xf32>
    %223 = math.exp %222 : vector<1x16x96xf32>
    %cst_132 = arith.constant 1.000000e+00 : f32
    %224 = vector.broadcast %cst_132 : f32 to vector<1x16x96xf32>
    %225 = arith.addf %224, %223 : vector<1x16x96xf32>
    %226 = arith.divf %224, %225 : vector<1x16x96xf32>
    %227 = arith.mulf %195, %226 : vector<1x16x96xf32>
    %228 = vector.shape_cast %227 : vector<1x16x96xf32> to vector<16x96xf32>
    %229 = arith.truncf %228 : vector<16x96xf32> to vector<16x96xbf16>
    %c0_133 = arith.constant 0 : index
    %c0_134 = arith.constant 0 : index
    %230 = vector.load %arg8[%c0_133, %c0_134] : memref<96x32xbf16, #tpu.memory_space<vmem>>, vector<96x32xbf16>
    %cst_135 = arith.constant dense<0.000000e+00> : vector<16x32xf32>
    %231 = tpu.matmul %229, %230, %cst_135 {dimension_numbers = #tpu.dot_dimension_numbers<[1], [0], [0], [1], [0, 0, 1, 1], [], []>} : vector<16x96xbf16>, vector<96x32xbf16>, vector<16x32xf32> -> vector<16x32xf32>
    %c13 = arith.constant 13 : index
    %c0_136 = arith.constant 0 : index
    %232 = vector.load %arg9[%c13, %c0_136] : memref<25x96xf32, #tpu.memory_space<vmem>>, vector<1x32xf32>
    %233 = vector.broadcast %232 : vector<1x32xf32> to vector<16x32xf32>
    %234 = arith.addf %231, %233 : vector<16x32xf32>
    %235 = arith.addf %158, %234 : vector<16x32xf32>
    %236 = arith.addf %235, %134 : vector<16x32xf32>
    %237 = vector.shape_cast %236 : vector<16x32xf32> to vector<1x16x32xf32>
    %c0_137 = arith.constant 0 : index
    %c0_138 = arith.constant 0 : index
    %c0_139 = arith.constant 0 : index
    %238 = vector.load %arg10[%c0_137, %c0_138, %c0_139] : memref<1x16x32xf32, #tpu.memory_space<vmem>>, vector<1x16x32xf32>
    tpu.vector_store %arg10[%c0_137, %c0_138, %c0_139], %237 {strides = array<i32>} : memref<1x16x32xf32, #tpu.memory_space<vmem>>, vector<1x16x32xf32>,
    return
  }
  func.func @transform_0(%arg0: i32) -> (i32, i32, i32) {
    %c0_i32 = arith.constant 0 : i32
    %c0_i32_0 = arith.constant 0 : i32
    %c0_i32_1 = arith.constant 0 : i32
    return %arg0, %c0_i32, %c0_i32_0 : i32, i32, i32
  }
  func.func @transform_1(%arg0: i32) -> (i32, i32) {
    %c0_i32 = arith.constant 0 : i32
    %c0_i32_0 = arith.constant 0 : i32
    %c0_i32_1 = arith.constant 0 : i32
    return %c0_i32, %c0_i32_0 : i32, i32
  }
  func.func @transform_2(%arg0: i32) -> (i32, i32) {
    %c0_i32 = arith.constant 0 : i32
    %c0_i32_0 = arith.constant 0 : i32
    %c0_i32_1 = arith.constant 0 : i32
    return %c0_i32, %c0_i32_0 : i32, i32
  }
  func.func @transform_3(%arg0: i32) -> (i32, i32) {
    %c0_i32 = arith.constant 0 : i32
    %c0_i32_0 = arith.constant 0 : i32
    %c0_i32_1 = arith.constant 0 : i32
    return %c0_i32, %c0_i32_0 : i32, i32
  }
  func.func @transform_4(%arg0: i32) -> (i32, i32) {
    %c0_i32 = arith.constant 0 : i32
    %c0_i32_0 = arith.constant 0 : i32
    %c0_i32_1 = arith.constant 0 : i32
    return %c0_i32, %c0_i32_0 : i32, i32
  }
  func.func @transform_5(%arg0: i32) -> (i32, i32) {
    %c0_i32 = arith.constant 0 : i32
    %c0_i32_0 = arith.constant 0 : i32
    %c0_i32_1 = arith.constant 0 : i32
    return %c0_i32, %c0_i32_0 : i32, i32
  }
  func.func @transform_6(%arg0: i32) -> (i32, i32) {
    %c0_i32 = arith.constant 0 : i32
    %c0_i32_0 = arith.constant 0 : i32
    %c0_i32_1 = arith.constant 0 : i32
    return %c0_i32, %c0_i32_0 : i32, i32
  }
  func.func @transform_7(%arg0: i32) -> (i32, i32) {
    %c0_i32 = arith.constant 0 : i32
    %c0_i32_0 = arith.constant 0 : i32
    %c0_i32_1 = arith.constant 0 : i32
    return %c0_i32, %c0_i32_0 : i32, i32
  }
  func.func @transform_8(%arg0: i32) -> (i32, i32) {
    %c0_i32 = arith.constant 0 : i32
    %c0_i32_0 = arith.constant 0 : i32
    %c0_i32_1 = arith.constant 0 : i32
    return %c0_i32, %c0_i32_0 : i32, i32
  }
  func.func @transform_9(%arg0: i32) -> (i32, i32, i32) {
    %c0_i32 = arith.constant 0 : i32
    %c0_i32_0 = arith.constant 0 : i32
    %c0_i32_1 = arith.constant 0 : i32
    return %arg0, %c0_i32, %c0_i32_0 : i32, i32, i32
  }
}

</mosaic_0001>

<llo_original>
// kernel: mul.31
$region0: #{mul.31}
  #allocation0 [shape = 's32[1]{0}', space=sflag, size = 0x4, scoped, tag = 'scoped memory for mul.31']
  %s0 = inlined_call_operand.vmem [shape: f32[1,32], index: 0, kind: input, shape index: {}]
  %s1 = inlined_call_operand.vmem [shape: f32[1,32], index: 1, kind: input, shape index: {}]
  %s2 = inlined_call_operand.vmem [shape: f32[1,32], index: 2, kind: output, shape index: {}]
  %v3 = vld [vmem:[%s0] sm:$0x1]
  %v4 = vld [vmem:[%s1] sm:$0x1]
  %5 = xla_tuple %v3, %v4
  %6 = xla_tuple %5
  %v7 = vmul.f32 %v3, %v4
  %8 = xla_tuple %v7
  %9 = vst [vmem:[%s2] sm:$0x1] %v7

// kernel: local_transformer.1
$region0: #{local_transformer.1}
  #allocation0 [shape = 'u32[]', space=smem, size = 0x4, offset = 0x4, fixed_abs, tag = 'smem constant byte address 0x4 - core index']
  #allocation1 [shape = 'u32[144,128]{1,0:T(1,128)}', space=vmem, size = 0x12000, scoped, tag = 'internal scratch']
  #allocation2 [shape = 'f32[1,20,32]{2,1,0:T(8,128)}', space=vmem, size = 0x3000, scoped, tag = 'scratch operand']
  #allocation3 [shape = 'f32[1,18,96]{2,1,0:T(8,128)}', space=vmem, size = 0x3000, scoped, tag = 'scratch operand']
  %s0 = inlined_call_operand.hbm [shape: f32[2,16,32], index: 0, kind: input, shape index: {}]
  %s1 = inlined_call_operand.hbm [shape: bf16[32,32], index: 1, kind: input, shape index: {}]
  %s2 = inlined_call_operand.hbm [shape: bf16[32,32], index: 2, kind: input, shape index: {}]
  %s3 = inlined_call_operand.hbm [shape: bf16[32,64], index: 3, kind: input, shape index: {}]
  %s4 = inlined_call_operand.hbm [shape: bf16[64,32], index: 4, kind: input, shape index: {}]
  %s5 = inlined_call_operand.hbm [shape: bf16[32,96], index: 5, kind: input, shape index: {}]
  %s6 = inlined_call_operand.hbm [shape: bf16[32,96], index: 6, kind: input, shape index: {}]
  %s7 = inlined_call_operand.hbm [shape: bf16[96,32], index: 7, kind: input, shape index: {}]
  %s8 = inlined_call_operand.hbm [shape: f32[25,96], index: 8, kind: input, shape index: {}]
  %s9 = inlined_call_operand.hbm [shape: f32[2,16,32], index: 9, kind: output, shape index: {}]
  %s10 = sld [smem:[#allocation0]]
  $region105: #{local_transformer.1} parent=0
    _
  %s12 = ssub.s32 1, %s10
  %s13 = scalar_select 0, %s12, %s10
  $region1: #{local_transformer.1} parent=0
    #allocation4 [shape = 'u8[16384]{0}', space=vmem, size = 0x4000, scoped, tag = 'input window, operand 0']
    #allocation5 [shape = 's32[2]{0}', space=sflag, size = 0x8, scoped, tag = 'scoped memory for local_transformer.1']
    #allocation6 [shape = 's32[2]{0}', space=sflag, size = 0x8, scoped, tag = 'scoped memory for local_transformer.1']
    #allocation7 [shape = 'u8[8192]{0}', space=vmem, size = 0x2000, scoped, tag = 'input window, operand 1, single buffered']
    #allocation8 [shape = 's32[1]{0}', space=sflag, size = 0x4, scoped, tag = 'scoped memory for local_transformer.1']
    #allocation9 [shape = 'u8[8192]{0}', space=vmem, size = 0x2000, scoped, tag = 'input window, operand 2, single buffered']
    #allocation10 [shape = 'u8[8192]{0}', space=vmem, size = 0x2000, scoped, tag = 'input window, operand 3, single buffered']
    #allocation11 [shape = 's32[1]{0}', space=sflag, size = 0x4, scoped, tag = 'scoped memory for local_transformer.1']
    #allocation12 [shape = 'u8[16384]{0}', space=vmem, size = 0x4000, scoped, tag = 'input window, operand 4, single buffered']
    #allocation13 [shape = 'u8[8192]{0}', space=vmem, size = 0x2000, scoped, tag = 'input window, operand 5, single buffered']
    #allocation14 [shape = 's32[1]{0}', space=sflag, size = 0x4, scoped, tag = 'scoped memory for local_transformer.1']
    #allocation15 [shape = 'u8[8192]{0}', space=vmem, size = 0x2000, scoped, tag = 'input window, operand 6, single buffered']
    #allocation16 [shape = 'u8[24576]{0}', space=vmem, size = 0x6000, scoped, tag = 'input window, operand 7, single buffered']
    #allocation17 [shape = 's32[1]{0}', space=sflag, size = 0x4, scoped, tag = 'scoped memory for local_transformer.1']
    #allocation18 [shape = 'u8[16384]{0}', space=vmem, size = 0x4000, scoped, tag = 'input window, operand 8, single buffered']
    #allocation19 [shape = 'u8[16384]{0}', space=vmem, size = 0x4000, scoped, tag = 'output window, operand 0']
    %14 = vsyncpa [#allocation5], 0
    %s15 = scalar_lea.sflag [#allocation5], 1
    %16 = vsyncpa %s15, 0
    %17 = vsyncpa [#allocation8], 0
    %18 = vsyncpa [#allocation11], 0
    %19 = vsyncpa [#allocation14], 0
    %20 = vsyncpa [#allocation17], 0
    %21 = vsyncpa [#allocation6], 0
    %s22 = scalar_lea.sflag [#allocation6], 1
    %23 = vsyncpa %s22, 0
    loop: start=0, step=1, limit=4
    $region2: #{local_transformer.1} parent=1 // loop_pre_header
      _
    $region3: #{local_transformer.1} parent=1 // loop_header
      %s25 = sphi 0, %s29
      %p26 = scmp.ge.s32.totalorder %s25, 4
      %s35 = sphi 0, %s37
      %s38 = sphi 0, %s35
      %s39 = sphi 0, %s38
      %s55 = sphi 0, %s39
      %s59 = sphi 0, %s59
      %s61 = sphi 0, %s59
      %s62 = sphi 0, %s61
      %s76 = sphi 0, %s62
      %s80 = sphi 0, %s80
      %s82 = sphi 0, %s80
      %s83 = sphi 0, %s82
      %s97 = sphi 0, %s83
      %s101 = sphi 0, %s101
      %s103 = sphi 0, %s101
      %s104 = sphi 0, %s103
      %s118 = sphi 0, %s104
      %s122 = sphi 0, %s122
      %s124 = sphi 0, %s122
      %s125 = sphi 0, %s124
      %s139 = sphi 0, %s125
      %s143 = sphi 0, %s143
      %s145 = sphi 0, %s143
      %s146 = sphi 0, %s145
      %s160 = sphi 0, %s146
      %s164 = sphi 0, %s164
      %s166 = sphi 0, %s164
      %s167 = sphi 0, %s166
      %s181 = sphi 0, %s167
      %s185 = sphi 0, %s185
      %s187 = sphi 0, %s185
      %s188 = sphi 0, %s187
      %s202 = sphi 0, %s188
      %s206 = sphi 0, %s206
      %s208 = sphi 0, %s206
      %s209 = sphi 0, %s208
      %s223 = sphi 0, %s209
      %s229 = sphi 0, %s231
      %s232 = sphi 0, %s229
      %s233 = sphi 0, %s232
      %s249 = sphi 0, %s233
    $region4: #{local_transformer.1} parent=1 // loop_header_branch
      %28 = sbr.rel (%p26) target = $region8
    $region5: #{local_transformer.1} parent=1 // loop_body
      %s30 = ssub.s32 %s25, 1
      %s31 = ssub.s32 %s25, 2
      %s32 = sadd.s32 %s25, 1
      %s33 = ssub.s32 %s25, %s32
      %p34 = scmp.eq.s32.totalorder %s33, 0
      %s36 = sadd.s32 %s35, 1
      %s37 = scalar_select %p34, %s35, %s36
      %p40 = pneg %p34
      %p41 = scmp.eq.s32.totalorder %s25, 1
      %p42 = por %p40, %p41
      %p43 = scmp.ne.s32.totalorder %s35, %s38
      %p44 = scmp.eq.s32.totalorder %s25, 0
      %p45 = por %p43, %p44
      %p46 = scmp.ne.s32.totalorder %s35, %s38
      %p47 = scmp.eq.s32.totalorder %s30, 1
      %p48 = por %p46, %p47
      %p49 = scmp.ne.s32.totalorder %s38, %s39
      %p50 = scmp.eq.s32.totalorder %s30, 0
      %p51 = por %p49, %p50
      %p52 = scmp.ne.s32.totalorder %s38, %s39
      %p53 = scmp.eq.s32.totalorder %s31, 1
      %p54 = por %p52, %p53
      %p56 = scmp.ne.s32.totalorder %s39, %s55
      %p57 = scmp.eq.s32.totalorder %s31, 0
      %p58 = por %p56, %p57
      %s60 = sadd.s32 %s59, 1
      %p63 = scmp.eq.s32.totalorder %s25, 1
      %p64 = scmp.ne.s32.totalorder %s59, %s61
      %p65 = scmp.eq.s32.totalorder %s25, 0
      %p66 = por %p64, %p65
      %p67 = scmp.ne.s32.totalorder %s59, %s61
      %p68 = scmp.eq.s32.totalorder %s30, 1
      %p69 = por %p67, %p68
      %p70 = scmp.ne.s32.totalorder %s61, %s62
      %p71 = scmp.eq.s32.totalorder %s30, 0
      %p72 = por %p70, %p71
      %p73 = scmp.ne.s32.totalorder %s61, %s62
      %p74 = scmp.eq.s32.totalorder %s31, 1
      %p75 = por %p73, %p74
      %p77 = scmp.ne.s32.totalorder %s62, %s76
      %p78 = scmp.eq.s32.totalorder %s31, 0
      %p79 = por %p77, %p78
      %s81 = sadd.s32 %s80, 1
      %p84 = scmp.eq.s32.totalorder %s25, 1
      %p85 = scmp.ne.s32.totalorder %s80, %s82
      %p86 = scmp.eq.s32.totalorder %s25, 0
      %p87 = por %p85, %p86
      %p88 = scmp.ne.s32.totalorder %s80, %s82
      %p89 = scmp.eq.s32.totalorder %s30, 1
      %p90 = por %p88, %p89
      %p91 = scmp.ne.s32.totalorder %s82, %s83
      %p92 = scmp.eq.s32.totalorder %s30, 0
      %p93 = por %p91, %p92
      %p94 = scmp.ne.s32.totalorder %s82, %s83
      %p95 = scmp.eq.s32.totalorder %s31, 1
      %p96 = por %p94, %p95
      %p98 = scmp.ne.s32.totalorder %s83, %s97
      %p99 = scmp.eq.s32.totalorder %s31, 0
      %p100 = por %p98, %p99
      %s102 = sadd.s32 %s101, 1
      %p105 = scmp.eq.s32.totalorder %s25, 1
      %p106 = scmp.ne.s32.totalorder %s101, %s103
      %p107 = scmp.eq.s32.totalorder %s25, 0
      %p108 = por %p106, %p107
      %p109 = scmp.ne.s32.totalorder %s101, %s103
      %p110 = scmp.eq.s32.totalorder %s30, 1
      %p111 = por %p109, %p110
      %p112 = scmp.ne.s32.totalorder %s103, %s104
      %p113 = scmp.eq.s32.totalorder %s30, 0
      %p114 = por %p112, %p113
      %p115 = scmp.ne.s32.totalorder %s103, %s104
      %p116 = scmp.eq.s32.totalorder %s31, 1
      %p117 = por %p115, %p116
      %p119 = scmp.ne.s32.totalorder %s104, %s118
      %p120 = scmp.eq.s32.totalorder %s31, 0
      %p121 = por %p119, %p120
      %s123 = sadd.s32 %s122, 1
      %p126 = scmp.eq.s32.totalorder %s25, 1
      %p127 = scmp.ne.s32.totalorder %s122, %s124
      %p128 = scmp.eq.s32.totalorder %s25, 0
      %p129 = por %p127, %p128
      %p130 = scmp.ne.s32.totalorder %s122, %s124
      %p131 = scmp.eq.s32.totalorder %s30, 1
      %p132 = por %p130, %p131
      %p133 = scmp.ne.s32.totalorder %s124, %s125
      %p134 = scmp.eq.s32.totalorder %s30, 0
      %p135 = por %p133, %p134
      %p136 = scmp.ne.s32.totalorder %s124, %s125
      %p137 = scmp.eq.s32.totalorder %s31, 1
      %p138 = por %p136, %p137
      %p140 = scmp.ne.s32.totalorder %s125, %s139
      %p141 = scmp.eq.s32.totalorder %s31, 0
      %p142 = por %p140, %p141
      %s144 = sadd.s32 %s143, 1
      %p147 = scmp.eq.s32.totalorder %s25, 1
      %p148 = scmp.ne.s32.totalorder %s143, %s145
      %p149 = scmp.eq.s32.totalorder %s25, 0
      %p150 = por %p148, %p149
      %p151 = scmp.ne.s32.totalorder %s143, %s145
      %p152 = scmp.eq.s32.totalorder %s30, 1
      %p153 = por %p151, %p152
      %p154 = scmp.ne.s32.totalorder %s145, %s146
      %p155 = scmp.eq.s32.totalorder %s30, 0
      %p156 = por %p154, %p155
      %p157 = scmp.ne.s32.totalorder %s145, %s146
      %p158 = scmp.eq.s32.totalorder %s31, 1
      %p159 = por %p157, %p158
      %p161 = scmp.ne.s32.totalorder %s146, %s160
      %p162 = scmp.eq.s32.totalorder %s31, 0
      %p163 = por %p161, %p162
      %s165 = sadd.s32 %s164, 1
      %p168 = scmp.eq.s32.totalorder %s25, 1
      %p169 = scmp.ne.s32.totalorder %s164, %s166
      %p170 = scmp.eq.s32.totalorder %s25, 0
      %p171 = por %p169, %p170
      %p172 = scmp.ne.s32.totalorder %s164, %s166
      %p173 = scmp.eq.s32.totalorder %s30, 1
      %p174 = por %p172, %p173
      %p175 = scmp.ne.s32.totalorder %s166, %s167
      %p176 = scmp.eq.s32.totalorder %s30, 0
      %p177 = por %p175, %p176
      %p178 = scmp.ne.s32.totalorder %s166, %s167
      %p179 = scmp.eq.s32.totalorder %s31, 1
      %p180 = por %p178, %p179
      %p182 = scmp.ne.s32.totalorder %s167, %s181
      %p183 = scmp.eq.s32.totalorder %s31, 0
      %p184 = por %p182, %p183
      %s186 = sadd.s32 %s185, 1
      %p189 = scmp.eq.s32.totalorder %s25, 1
      %p190 = scmp.ne.s32.totalorder %s185, %s187
      %p191 = scmp.eq.s32.totalorder %s25, 0
      %p192 = por %p190, %p191
      %p193 = scmp.ne.s32.totalorder %s185, %s187
      %p194 = scmp.eq.s32.totalorder %s30, 1
      %p195 = por %p193, %p194
      %p196 = scmp.ne.s32.totalorder %s187, %s188
      %p197 = scmp.eq.s32.totalorder %s30, 0
      %p198 = por %p196, %p197
      %p199 = scmp.ne.s32.totalorder %s187, %s188
      %p200 = scmp.eq.s32.totalorder %s31, 1
      %p201 = por %p199, %p200
      %p203 = scmp.ne.s32.totalorder %s188, %s202
      %p204 = scmp.eq.s32.totalorder %s31, 0
      %p205 = por %p203, %p204
      %s207 = sadd.s32 %s206, 1
      %p210 = scmp.eq.s32.totalorder %s25, 1
      %p211 = scmp.ne.s32.totalorder %s206, %s208
      %p212 = scmp.eq.s32.totalorder %s25, 0
      %p213 = por %p211, %p212
      %p214 = scmp.ne.s32.totalorder %s206, %s208
      %p215 = scmp.eq.s32.totalorder %s30, 1
      %p216 = por %p214, %p215
      %p217 = scmp.ne.s32.totalorder %s208, %s209
      %p218 = scmp.eq.s32.totalorder %s30, 0
      %p219 = por %p217, %p218
      %p220 = scmp.ne.s32.totalorder %s208, %s209
      %p221 = scmp.eq.s32.totalorder %s31, 1
      %p222 = por %p220, %p221
      %p224 = scmp.ne.s32.totalorder %s209, %s223
      %p225 = scmp.eq.s32.totalorder %s31, 0
      %p226 = por %p224, %p225
      %s227 = ssub.s32 %s25, %s32
      %p228 = scmp.eq.s32.totalorder %s227, 0
      %s230 = sadd.s32 %s229, 1
      %s231 = scalar_select %p228, %s229, %s230
      %p234 = pneg %p228
      %p235 = scmp.eq.s32.totalorder %s25, 1
      %p236 = por %p234, %p235
      %p237 = scmp.ne.s32.totalorder %s229, %s232
      %p238 = scmp.eq.s32.totalorder %s25, 0
      %p239 = por %p237, %p238
      %p240 = scmp.ne.s32.totalorder %s229, %s232
      %p241 = scmp.eq.s32.totalorder %s30, 1
      %p242 = por %p240, %p241
      %p243 = scmp.ne.s32.totalorder %s232, %s233
      %p244 = scmp.eq.s32.totalorder %s30, 0
      %p245 = por %p243, %p244
      %p246 = scmp.ne.s32.totalorder %s232, %s233
      %p247 = scmp.eq.s32.totalorder %s31, 1
      %p248 = por %p246, %p247
      %p250 = scmp.ne.s32.totalorder %s233, %s249
      %p251 = scmp.eq.s32.totalorder %s31, 0
      %p252 = por %p250, %p251
      %p253 = scmp.le.s32.totalorder 1, %s25
      %p254 = scmp.lt.s32.totalorder %s25, 3
      %p255 = pnand %p253, %p254
      %p256 = pneg %p255
      // Predicated region
      $region9: #{local_transformer.1} parent=5 // pred_check
        _
      $region10: #{local_transformer.1} parent=5 // pred_check_branch
        %258 = sbr.rel (%p255) target = $region12
      $region11: #{local_transformer.1} parent=5 // pred_region
        %s259 = ssub.s32 %s25, 1
        // Predicated region
        $region13: #{local_transformer.1} parent=11 // pred_check
          %p260 = pneg %p72
        $region14: #{local_transformer.1} parent=11 // pred_check_branch
          %262 = sbr.rel (%p260) target = $region16
        $region15: #{local_transformer.1} parent=11 // pred_region
          %s264 = ssub.s32 256, 256
          %265 = vsyncadd [#allocation8], %s264
          %s266 = sshll.u32 [#allocation7], 4
          %s267 = int_to_ptr.vmem [resolvable:$true] %s266
          %272 = dma.hbm_to_vmem [thread:$0]  %s1, 256, %s267, [#allocation8], 64, 64, 4
        $region16: #{local_transformer.1} parent=11 // pred_fallthru
          _
        // Predicated region
        $region17: #{local_transformer.1} parent=11 // pred_check
          %p273 = pneg %p93
        $region18: #{local_transformer.1} parent=11 // pred_check_branch
          %275 = sbr.rel (%p273) target = $region20
        $region19: #{local_transformer.1} parent=11 // pred_region
          %s277 = ssub.s32 256, 256
          %278 = vsyncadd [#allocation8], %s277
          %s279 = sshll.u32 [#allocation9], 4
          %s280 = int_to_ptr.vmem [resolvable:$true] %s279
          %285 = dma.hbm_to_vmem [thread:$0]  %s2, 256, %s280, [#allocation8], 64, 64, 4
        $region20: #{local_transformer.1} parent=11 // pred_fallthru
          _
        // Predicated region
        $region21: #{local_transformer.1} parent=11 // pred_check
          %p286 = pneg %p114
        $region22: #{local_transformer.1} parent=11 // pred_check_branch
          %288 = sbr.rel (%p286) target = $region24
        $region23: #{local_transformer.1} parent=11 // pred_region
          %s290 = ssub.s32 256, 256
          %291 = vsyncadd [#allocation11], %s290
          %s292 = sshll.u32 [#allocation10], 4
          %s293 = int_to_ptr.vmem [resolvable:$true] %s292
          %298 = dma.hbm_to_vmem [thread:$0]  %s3, 256, %s293, [#allocation11], 64, 64, 4
        $region24: #{local_transformer.1} parent=11 // pred_fallthru
          _
        // Predicated region
        $region25: #{local_transformer.1} parent=11 // pred_check
          %p299 = pneg %p135
        $region26: #{local_transformer.1} parent=11 // pred_check_branch
          %301 = sbr.rel (%p299) target = $region28
        $region27: #{local_transformer.1} parent=11 // pred_region
          %s303 = ssub.s32 512, 512
          %304 = vsyncadd [#allocation11], %s303
          %s305 = sshll.u32 [#allocation12], 4
          %s306 = int_to_ptr.vmem [resolvable:$true] %s305
          %311 = dma.hbm_to_vmem [thread:$0]  %s4, 512, %s306, [#allocation11], 64, 64, 4
        $region28: #{local_transformer.1} parent=11 // pred_fallthru
          _
        // Predicated region
        $region29: #{local_transformer.1} parent=11 // pred_check
          %p312 = pneg %p156
        $region30: #{local_transformer.1} parent=11 // pred_check_branch
          %314 = sbr.rel (%p312) target = $region32
        $region31: #{local_transformer.1} parent=11 // pred_region
          %s316 = ssub.s32 256, 256
          %317 = vsyncadd [#allocation14], %s316
          %s318 = sshll.u32 [#allocation13], 4
          %s319 = int_to_ptr.vmem [resolvable:$true] %s318
          %324 = dma.hbm_to_vmem [thread:$0]  %s5, 256, %s319, [#allocation14], 64, 64, 4
        $region32: #{local_transformer.1} parent=11 // pred_fallthru
          _
        // Predicated region
        $region33: #{local_transformer.1} parent=11 // pred_check
          %p325 = pneg %p177
        $region34: #{local_transformer.1} parent=11 // pred_check_branch
          %327 = sbr.rel (%p325) target = $region36
        $region35: #{local_transformer.1} parent=11 // pred_region
          %s329 = ssub.s32 256, 256
          %330 = vsyncadd [#allocation14], %s329
          %s331 = sshll.u32 [#allocation15], 4
          %s332 = int_to_ptr.vmem [resolvable:$true] %s331
          %337 = dma.hbm_to_vmem [thread:$0]  %s6, 256, %s332, [#allocation14], 64, 64, 4
        $region36: #{local_transformer.1} parent=11 // pred_fallthru
          _
        // Predicated region
        $region37: #{local_transformer.1} parent=11 // pred_check
          %p338 = pneg %p198
        $region38: #{local_transformer.1} parent=11 // pred_check_branch
          %340 = sbr.rel (%p338) target = $region40
        $region39: #{local_transformer.1} parent=11 // pred_region
          %s342 = ssub.s32 768, 768
          %343 = vsyncadd [#allocation17], %s342
          %s344 = sshll.u32 [#allocation16], 4
          %s345 = int_to_ptr.vmem [resolvable:$true] %s344
          %350 = dma.hbm_to_vmem [thread:$0]  %s7, 768, %s345, [#allocation17], 64, 64, 4
        $region40: #{local_transformer.1} parent=11 // pred_fallthru
          _
        // Predicated region
        $region41: #{local_transformer.1} parent=11 // pred_check
          %p351 = pneg %p219
        $region42: #{local_transformer.1} parent=11 // pred_check_branch
          %353 = sbr.rel (%p351) target = $region44
        $region43: #{local_transformer.1} parent=11 // pred_region
          %s355 = ssub.s32 512, 512
          %356 = vsyncadd [#allocation17], %s355
          %s357 = sshll.u32 [#allocation18], 4
          %s358 = int_to_ptr.vmem [resolvable:$true] %s357
          %363 = dma.hbm_to_vmem [thread:$0]  %s8, 512, %s358, [#allocation17], 128, 128, 8
        $region44: #{local_transformer.1} parent=11 // pred_fallthru
          _
      $region12: #{local_transformer.1} parent=5 // pred_fallthru
        _
      %p364 = scmp.lt.s32.totalorder %s25, 2
      // Predicated region
      $region45: #{local_transformer.1} parent=5 // pred_check
        %p365 = pneg %p364
      $region46: #{local_transformer.1} parent=5 // pred_check_branch
        %367 = sbr.rel (%p365) target = $region48
      $region47: #{local_transformer.1} parent=5 // pred_region
        // Predicated region
        $region49: #{local_transformer.1} parent=47 // pred_check
          %p368 = pneg %p45
        $region50: #{local_transformer.1} parent=47 // pred_check_branch
          %370 = sbr.rel (%p368) target = $region52
        $region51: #{local_transformer.1} parent=47 // pred_region
          %s371 = sand.u32 %s35, 1
          %s372 = scalar_lea.sflag [#allocation5], %s371
          %s373 = sand.u32 %s35, 1
          %s374 = smul.addr %s373, 16
          %s375 = scalar_lea.vmem [#allocation4], %s374
          %s377 = ssub.s32 256, 256
          %378 = vsyncadd %s372, %s377
          %s379 = smul.addr %s25, 2
          %s380 = smul.addr %s379, 128
          %s381 = scalar_lea.hbm %s0, %s380
          %s382 = sshll.u32 %s375, 4
          %s383 = int_to_ptr.vmem [resolvable:$true] %s382
          %388 = dma.hbm_to_vmem [thread:$0]  %s381, 256, %s383, %s372, 128, 128, 8
        $region52: #{local_transformer.1} parent=47 // pred_fallthru
          _
      $region48: #{local_transformer.1} parent=5 // pred_fallthru
        _
      %p389 = scmp.le.s32.totalorder 1, %s25
      %p390 = scmp.lt.s32.totalorder %s25, 3
      %p391 = pnand %p389, %p390
      %p392 = pneg %p391
      // Predicated region
      $region53: #{local_transformer.1} parent=5 // pred_check
        _
      $region54: #{local_transformer.1} parent=5 // pred_check_branch
        %394 = sbr.rel (%p391) target = $region56
      $region55: #{local_transformer.1} parent=5 // pred_region
        %s395 = ssub.s32 %s25, 1
        %s396 = sand.u32 %s38, 1
        %s397 = scalar_lea.sflag [#allocation5], %s396
        %s398 = sand.u32 %s38, 1
        %s399 = smul.addr %s398, 16
        %s400 = scalar_lea.vmem [#allocation4], %s399
        // Predicated region
        $region57: #{local_transformer.1} parent=55 // pred_check
          %p401 = pneg %p51
        $region58: #{local_transformer.1} parent=55 // pred_check_branch
          %403 = sbr.rel (%p401) target = $region60
        $region59: #{local_transformer.1} parent=55 // pred_region
          %404 = dma.done %s397, 256
        $region60: #{local_transformer.1} parent=55 // pred_fallthru
          _
        // Predicated region
        $region61: #{local_transformer.1} parent=55 // pred_check
          %p405 = pneg %p72
        $region62: #{local_transformer.1} parent=55 // pred_check_branch
          %407 = sbr.rel (%p405) target = $region64
        $region63: #{local_transformer.1} parent=55 // pred_region
          %408 = dma.done [#allocation8], 256
        $region64: #{local_transformer.1} parent=55 // pred_fallthru
          _
        // Predicated region
        $region65: #{local_transformer.1} parent=55 // pred_check
          %p409 = pneg %p93
        $region66: #{local_transformer.1} parent=55 // pred_check_branch
          %411 = sbr.rel (%p409) target = $region68
        $region67: #{local_transformer.1} parent=55 // pred_region
          %412 = dma.done [#allocation8], 256
        $region68: #{local_transformer.1} parent=55 // pred_fallthru
          _
        // Predicated region
        $region69: #{local_transformer.1} parent=55 // pred_check
          %p413 = pneg %p114
        $region70: #{local_transformer.1} parent=55 // pred_check_branch
          %415 = sbr.rel (%p413) target = $region72
        $region71: #{local_transformer.1} parent=55 // pred_region
          %416 = dma.done [#allocation11], 256
        $region72: #{local_transformer.1} parent=55 // pred_fallthru
          _
        // Predicated region
        $region73: #{local_transformer.1} parent=55 // pred_check
          %p417 = pneg %p135
        $region74: #{local_transformer.1} parent=55 // pred_check_branch
          %419 = sbr.rel (%p417) target = $region76
        $region75: #{local_transformer.1} parent=55 // pred_region
          %420 = dma.done [#allocation11], 512
        $region76: #{local_transformer.1} parent=55 // pred_fallthru
          _
        // Predicated region
        $region77: #{local_transformer.1} parent=55 // pred_check
          %p421 = pneg %p156
        $region78: #{local_transformer.1} parent=55 // pred_check_branch
          %423 = sbr.rel (%p421) target = $region80
        $region79: #{local_transformer.1} parent=55 // pred_region
          %424 = dma.done [#allocation14], 256
        $region80: #{local_transformer.1} parent=55 // pred_fallthru
          _
        // Predicated region
        $region81: #{local_transformer.1} parent=55 // pred_check
          %p425 = pneg %p177
        $region82: #{local_transformer.1} parent=55 // pred_check_branch
          %427 = sbr.rel (%p425) target = $region84
        $region83: #{local_transformer.1} parent=55 // pred_region
          %428 = dma.done [#allocation14], 256
        $region84: #{local_transformer.1} parent=55 // pred_fallthru
          _
        // Predicated region
        $region85: #{local_transformer.1} parent=55 // pred_check
          %p429 = pneg %p198
        $region86: #{local_transformer.1} parent=55 // pred_check_branch
          %431 = sbr.rel (%p429) target = $region88
        $region87: #{local_transformer.1} parent=55 // pred_region
          %432 = dma.done [#allocation17], 768
        $region88: #{local_transformer.1} parent=55 // pred_fallthru
          _
        // Predicated region
        $region89: #{local_transformer.1} parent=55 // pred_check
          %p433 = pneg %p219
        $region90: #{local_transformer.1} parent=55 // pred_check_branch
          %435 = sbr.rel (%p433) target = $region92
        $region91: #{local_transformer.1} parent=55 // pred_region
          %436 = dma.done [#allocation17], 512
        $region92: #{local_transformer.1} parent=55 // pred_fallthru
          _
        %s437 = sand.u32 %s38, 1
        %s438 = scalar_lea.sflag [#allocation5], %s437
        %s439 = sand.u32 %s38, 1
        %s440 = smul.addr %s439, 16
        %s441 = scalar_lea.vmem [#allocation4], %s440
        %p442 = pneg %p51
        %p443 = pneg %p48
        %p444 = pneg %p72
        %p445 = pneg %p69
        %p446 = pneg %p93
        %p447 = pneg %p90
        %p448 = pneg %p114
        %p449 = pneg %p111
        %p450 = pneg %p135
        %p451 = pneg %p132
        %p452 = pneg %p156
        %p453 = pneg %p153
        %p454 = pneg %p177
        %p455 = pneg %p174
        %p456 = pneg %p198
        %p457 = pneg %p195
        %p458 = pneg %p219
        %p459 = pneg %p216
        %p460 = pneg %p245
        %p461 = pneg %p242
        %s462 = sand.u32 %s232, 1
        %s463 = scalar_lea.sflag [#allocation6], %s462
        %s464 = sand.u32 %s232, 1
        %s465 = smul.addr %s464, 16
        %s466 = scalar_lea.vmem [#allocation19], %s465
        %v468 = vld [vmem:[%s400] sm:$0xff]
        %v469 = vld [vmem:[%s400 + $0x8] sm:$0xff]
        %v470 = vld [vmem:[#allocation18] sm:$0x1]
        %v471 = vld [vmem:[#allocation18 + $0x1] sm:$0x1]
        %vm472 = vcmask 261120
        %v473 = vsel %vm472, %v468, 0.0
        %474 = vadd.xlane.f32.xlu0 %v473
        %v475 = vpop.xlane.xlu0 %474
        %v476 = vsel %vm472, %v469, 0.0
        %477 = vadd.xlane.f32.xlu0 %v476
        %v478 = vpop.xlane.xlu0 %477
        %v479 = vrcp.pop 32.0
        %v480 = vmul.f32 %v475, %v479
        %v481 = vmul.f32 %v478, %v479
        %v482 = vmul.f32 %v468, %v468
        %v483 = vmul.f32 %v469, %v469
        %v484 = vsel %vm472, %v482, 0.0
        %485 = vadd.xlane.f32.xlu0 %v484
        %v486 = vpop.xlane.xlu0 %485
        %v487 = vsel %vm472, %v483, 0.0
        %488 = vadd.xlane.f32.xlu0 %v487
        %v489 = vpop.xlane.xlu0 %488
        %v490 = vmul.f32 %v486, %v479
        %v491 = vmul.f32 %v489, %v479
        %v492 = vmul.f32 %v480, %v480
        %v493 = vmul.f32 %v481, %v481
        %v494 = vsub.f32 %v490, %v492
        %v495 = vsub.f32 %v491, %v493
        %v496 = vsub.f32 %v468, %v480
        %v497 = vsub.f32 %v469, %v481
        %v498 = vadd.f32 %v494, 1e-05
        %v499 = vadd.f32 %v495, 1e-05
        %v500 = vrsqrt.pop %v498
        %v501 = vrsqrt.pop %v499
        %v502 = vmul.f32 %v496, %v500
        %v503 = vmul.f32 %v497, %v501
        %v504 = vlaneseq
        %v505 = vshrl.u32 %v504, 7
        %v506 = vsub.s32 0, %v505
        %v507 = vrot.slane %v470, %v506
        %v508 = vmul.f32 %v502, %v507
        %v509 = vmul.f32 %v503, %v507
        %v510 = vlaneseq
        %v511 = vshrl.u32 %v510, 7
        %v512 = vsub.s32 0, %v511
        %v513 = vrot.slane %v471, %v512
        %v514 = vadd.f32 %v508, %v513
        %v515 = vadd.f32 %v509, %v513
        %v516 = vpack.c.bf16 %v515, %v514
        %v517 = vld [vmem:[#allocation7] sm:$0xf]
        %v518 = vld [vmem:[#allocation7 + $0x4] sm:$0xf]
        %v519 = vld [vmem:[#allocation7 + $0x8] sm:$0xf]
        %v520 = vld [vmem:[#allocation7 + $0xc] sm:$0xf]
        %v521 = vld [vmem:[#allocation18 + $0x2] sm:$0x1]
        %v522 = vlaneseq
        %v523 = vshrl.u32 %v522, 7
        %v524 = vsub.s32 0, %v523
        %v525 = vrot.slane %v521, %v524
        %v530 = vunpack.c.l.b16 %v517
        %v531 = vunpack.c.l.b16 %v518
        %v532 = vunpack.c.l.b16 %v519
        %v533 = vunpack.c.l.b16 %v520
        %v534 = vpack.c.b16 %v531, %v530
        %v535 = vpack.c.b16 %v533, %v532
        %v539 = vsel %vm472, %v516, 0
        %541 = vmatprep.subr.bf16.mxu0 0
        %542 = vmatpush1.bf16.msra.mxu0 %v534
        %543 = vmatprep.subr.bf16.mxu0 0
        %544 = vmatpush1.bf16.msra.mxu0 %v535
        %545 = vmatprep.subr.bf16.mxu0 0
        %546 = vmatpush1.bf16.msra.mxu0 0
        %547 = vmatprep.subr.bf16.mxu0 0
        %548 = vmatpush1.bf16.msra.mxu0 0
        %549 = vmatprep.subr.bf16.mxu0 0
        %550 = vmatpush1.bf16.msra.mxu0 0
        %551 = vmatprep.subr.bf16.mxu0 0
        %552 = vmatpush1.bf16.msra.mxu0 0
        %553 = vmatprep.subr.bf16.mxu0 0
        %554 = vmatpush1.bf16.msra.mxu0 0
        %555 = vmatprep.subr.bf16.mxu0 0
        %556 = vmatpush1.bf16.msra.mxu0 0
        %557 = vmatprep.subr.bf16.mxu0 0
        %558 = vmatpush1.bf16.msra.mxu0 0
        %559 = vmatprep.subr.bf16.mxu0 0
        %560 = vmatpush1.bf16.msra.mxu0 0
        %561 = vmatprep.subr.bf16.mxu0 0
        %562 = vmatpush1.bf16.msra.mxu0 0
        %563 = vmatprep.subr.bf16.mxu0 0
        %564 = vmatpush1.bf16.msra.mxu0 0
        %565 = vmatprep.subr.bf16.mxu0 0
        %566 = vmatpush1.bf16.msra.mxu0 0
        %567 = vmatprep.subr.bf16.mxu0 0
        %568 = vmatpush1.bf16.msra.mxu0 0
        %569 = vmatprep.subr.bf16.mxu0 0
        %570 = vmatpush1.bf16.msra.mxu0 0
        %571 = vmatprep.subr.bf16.mxu0 0
        %572 = vmatpush1.bf16.msra.mxu0 0
        %573 = vmatprep.mubr.bf16.mxu0 0
        %574 = vmatmul.mubr.bf16.gmra.mrb[0].mxu0 %v539
        %v575 = vpop.f32.mrb[0].mxu0
        %v576 = vadd.f32 %v525, %v575
        %v577 = vpop.f32.mrb[0].mxu0
        %v578 = vpop.f32.mrb[0].mxu0
        %v579 = vadd.f32 %v525, %v578
        %v580 = vpop.f32.mrb[0].mxu0
        %581 = vdwg.mxu0
        %v582 = vld [vmem:[#allocation9] sm:$0xf]
        %v583 = vld [vmem:[#allocation9 + $0x4] sm:$0xf]
        %v584 = vld [vmem:[#allocation9 + $0x8] sm:$0xf]
        %v585 = vld [vmem:[#allocation9 + $0xc] sm:$0xf]
        %v586 = vld [vmem:[#allocation18 + $0x3] sm:$0x1]
        %v587 = vlaneseq
        %v588 = vshrl.u32 %v587, 7
        %v589 = vsub.s32 0, %v588
        %v590 = vrot.slane %v586, %v589
        %v595 = vunpack.c.l.b16 %v582
        %v596 = vunpack.c.l.b16 %v583
        %v597 = vunpack.c.l.b16 %v584
        %v598 = vunpack.c.l.b16 %v585
        %v599 = vpack.c.b16 %v596, %v595
        %v600 = vpack.c.b16 %v598, %v597
        %603 = vmatprep.subr.bf16.mxu0 0
        %604 = vmatpush1.bf16.msra.mxu0 %v599
        %605 = vmatprep.subr.bf16.mxu0 0
        %606 = vmatpush1.bf16.msra.mxu0 %v600
        %607 = vmatprep.subr.bf16.mxu0 0
        %608 = vmatpush1.bf16.msra.mxu0 0
        %609 = vmatprep.subr.bf16.mxu0 0
        %610 = vmatpush1.bf16.msra.mxu0 0
        %611 = vmatprep.subr.bf16.mxu0 0
        %612 = vmatpush1.bf16.msra.mxu0 0
        %613 = vmatprep.subr.bf16.mxu0 0
        %614 = vmatpush1.bf16.msra.mxu0 0
        %615 = vmatprep.subr.bf16.mxu0 0
        %616 = vmatpush1.bf16.msra.mxu0 0
        %617 = vmatprep.subr.bf16.mxu0 0
        %618 = vmatpush1.bf16.msra.mxu0 0
        %619 = vmatprep.subr.bf16.mxu0 0
        %620 = vmatpush1.bf16.msra.mxu0 0
        %621 = vmatprep.subr.bf16.mxu0 0
        %622 = vmatpush1.bf16.msra.mxu0 0
        %623 = vmatprep.subr.bf16.mxu0 0
        %624 = vmatpush1.bf16.msra.mxu0 0
        %625 = vmatprep.subr.bf16.mxu0 0
        %626 = vmatpush1.bf16.msra.mxu0 0
        %627 = vmatprep.subr.bf16.mxu0 0
        %628 = vmatpush1.bf16.msra.mxu0 0
        %629 = vmatprep.subr.bf16.mxu0 0
        %630 = vmatpush1.bf16.msra.mxu0 0
        %631 = vmatprep.subr.bf16.mxu0 0
        %632 = vmatpush1.bf16.msra.mxu0 0
        %633 = vmatprep.subr.bf16.mxu0 0
        %634 = vmatpush1.bf16.msra.mxu0 0
        %635 = vmatprep.mubr.bf16.mxu0 0
        %636 = vmatmul.mubr.bf16.gmra.mrb[0].mxu0 %v539
        %v637 = vpop.f32.mrb[0].mxu0
        %v638 = vadd.f32 %v590, %v637
        %v639 = vpop.f32.mrb[0].mxu0
        %v640 = vpop.f32.mrb[0].mxu0
        %v641 = vadd.f32 %v590, %v640
        %v642 = vpop.f32.mrb[0].mxu0
        %643 = vdwg.mxu0
        %v644 = vxor.u32 %v638, 2147483648
        %v645 = vxor.u32 %v641, 2147483648
        %v646 = vmul.f32 %v644, 1.442695
        %v647 = vpow.pop %v646
        %v648 = vmul.f32 %v645, 1.442695
        %v649 = vpow.pop %v648
        %v650 = vadd.f32 %v647, 1.0
        %v651 = vadd.f32 %v649, 1.0
        %v652 = vrcp.pop %v650
        %v653 = vmul.f32 1.0, %v652
        %v654 = vrcp.pop %v651
        %v655 = vmul.f32 1.0, %v654
        %v656 = vmul.f32 %v576, %v653
        %v657 = vmul.f32 %v579, %v655
        %vm658 = vcmask 254976
        %659 = vst.msk [vmem:[#allocation2] sm:$0x3] %vm658, 0.0
        %660 = vst.msk [vmem:[#allocation2 + $0x12] sm:$0x3] %vm658, 0.0
        %661 = vst.msk [vmem:[#allocation2 + $0x2] sm:$0xff] %vm472, %v656
        %662 = vst.msk [vmem:[#allocation2 + $0xa] sm:$0xff] %vm472, %v657
        %v663 = vld [vmem:[#allocation18 + $0xe] sm:$0x1]
        %v664 = vld [vmem:[#allocation2] sm:$0xff]
        %v665 = vld [vmem:[#allocation2 + $0x8] sm:$0xff]
        %v666 = vlaneseq
        %v667 = vshrl.u32 %v666, 7
        %v668 = vsub.s32 0, %v667
        %v669 = vrot.slane %v663, %v668
        %v670 = vmul.f32 %v669, %v664
        %v671 = vmul.f32 %v669, %v665
        %v672 = vld [vmem:[#allocation18 + $0xf] sm:$0x1]
        %v673 = vld [vmem:[#allocation2 + $0x1] sm:$0xff]
        %v674 = vld [vmem:[#allocation2 + $0x9] sm:$0xff]
        %v675 = vlaneseq
        %v676 = vshrl.u32 %v675, 7
        %v677 = vsub.s32 0, %v676
        %v678 = vrot.slane %v672, %v677
        %v679 = vmul.f32 %v678, %v673
        %v680 = vmul.f32 %v678, %v674
        %v681 = vadd.f32 %v670, %v679
        %v682 = vadd.f32 %v671, %v680
        %v683 = vld [vmem:[#allocation18 + $0x10] sm:$0x1]
        %v684 = vld [vmem:[#allocation2 + $0x2] sm:$0xff]
        %v685 = vld [vmem:[#allocation2 + $0xa] sm:$0xff]
        %v686 = vlaneseq
        %v687 = vshrl.u32 %v686, 7
        %v688 = vsub.s32 0, %v687
        %v689 = vrot.slane %v683, %v688
        %v690 = vmul.f32 %v689, %v684
        %v691 = vmul.f32 %v689, %v685
        %v692 = vadd.f32 %v681, %v690
        %v693 = vadd.f32 %v682, %v691
        %v694 = vld [vmem:[#allocation18 + $0x11] sm:$0x1]
        %v695 = vld [vmem:[#allocation2 + $0x3] sm:$0xff]
        %v696 = vld [vmem:[#allocation2 + $0xb] sm:$0xff]
        %v697 = vlaneseq
        %v698 = vshrl.u32 %v697, 7
        %v699 = vsub.s32 0, %v698
        %v700 = vrot.slane %v694, %v699
        %v701 = vmul.f32 %v700, %v695
        %v702 = vmul.f32 %v700, %v696
        %v703 = vadd.f32 %v692, %v701
        %v704 = vadd.f32 %v693, %v702
        %v705 = vld [vmem:[#allocation18 + $0x12] sm:$0x1]
        %v706 = vld [vmem:[#allocation2 + $0x4] sm:$0xff]
        %v707 = vld [vmem:[#allocation2 + $0xc] sm:$0xff]
        %v708 = vlaneseq
        %v709 = vshrl.u32 %v708, 7
        %v710 = vsub.s32 0, %v709
        %v711 = vrot.slane %v705, %v710
        %v712 = vmul.f32 %v711, %v706
        %v713 = vmul.f32 %v711, %v707
        %v714 = vadd.f32 %v703, %v712
        %v715 = vadd.f32 %v704, %v713
        %v716 = vld [vmem:[#allocation18 + $0x4] sm:$0x1]
        %v717 = vlaneseq
        %v718 = vshrl.u32 %v717, 7
        %v719 = vsub.s32 0, %v718
        %v720 = vrot.slane %v716, %v719
        %v721 = vadd.f32 %v714, %v720
        %v722 = vadd.f32 %v715, %v720
        %v723 = vpack.c.bf16 %v722, %v721
        %v724 = vld [vmem:[#allocation10] sm:$0xf]
        %v725 = vld [vmem:[#allocation10 + $0x4] sm:$0xf]
        %v726 = vld [vmem:[#allocation10 + $0x8] sm:$0xf]
        %v727 = vld [vmem:[#allocation10 + $0xc] sm:$0xf]
        %v728 = vld [vmem:[#allocation18 + $0x5] sm:$0x1]
        %v729 = vlaneseq
        %v730 = vshrl.u32 %v729, 7
        %v731 = vsub.s32 0, %v730
        %v732 = vrot.slane %v728, %v731
        %v737 = vunpack.c.l.b16 %v724
        %v738 = vunpack.c.l.b16 %v725
        %v739 = vunpack.c.l.b16 %v726
        %v740 = vunpack.c.l.b16 %v727
        %v741 = vpack.c.b16 %v738, %v737
        %v742 = vpack.c.b16 %v740, %v739
        %v746 = vsel %vm472, %v723, 0
        %748 = vmatprep.subr.bf16.mxu0 0
        %749 = vmatpush1.bf16.msra.mxu0 %v741
        %750 = vmatprep.subr.bf16.mxu0 0
        %751 = vmatpush1.bf16.msra.mxu0 %v742
        %752 = vmatprep.subr.bf16.mxu0 0
        %753 = vmatpush1.bf16.msra.mxu0 0
        %754 = vmatprep.subr.bf16.mxu0 0
        %755 = vmatpush1.bf16.msra.mxu0 0
        %756 = vmatprep.subr.bf16.mxu0 0
        %757 = vmatpush1.bf16.msra.mxu0 0
        %758 = vmatprep.subr.bf16.mxu0 0
        %759 = vmatpush1.bf16.msra.mxu0 0
        %760 = vmatprep.subr.bf16.mxu0 0
        %761 = vmatpush1.bf16.msra.mxu0 0
        %762 = vmatprep.subr.bf16.mxu0 0
        %763 = vmatpush1.bf16.msra.mxu0 0
        %764 = vmatprep.subr.bf16.mxu0 0
        %765 = vmatpush1.bf16.msra.mxu0 0
        %766 = vmatprep.subr.bf16.mxu0 0
        %767 = vmatpush1.bf16.msra.mxu0 0
        %768 = vmatprep.subr.bf16.mxu0 0
        %769 = vmatpush1.bf16.msra.mxu0 0
        %770 = vmatprep.subr.bf16.mxu0 0
        %771 = vmatpush1.bf16.msra.mxu0 0
        %772 = vmatprep.subr.bf16.mxu0 0
        %773 = vmatpush1.bf16.msra.mxu0 0
        %774 = vmatprep.subr.bf16.mxu0 0
        %775 = vmatpush1.bf16.msra.mxu0 0
        %776 = vmatprep.subr.bf16.mxu0 0
        %777 = vmatpush1.bf16.msra.mxu0 0
        %778 = vmatprep.subr.bf16.mxu0 0
        %779 = vmatpush1.bf16.msra.mxu0 0
        %780 = vmatprep.mubr.bf16.mxu0 0
        %781 = vmatmul.mubr.bf16.gmra.mrb[0].mxu0 %v746
        %v782 = vpop.f32.mrb[0].mxu0
        %v783 = vadd.f32 %v732, %v782
        %v784 = vpop.f32.mrb[0].mxu0
        %v785 = vpop.f32.mrb[0].mxu0
        %v786 = vadd.f32 %v732, %v785
        %v787 = vpop.f32.mrb[0].mxu0
        %788 = vdwg.mxu0
        %v789 = vmul.f32 %v783, 0.5
        %v790 = vmul.f32 %v786, 0.5
        %v791 = vmul.f32 %v783, 0.70710677
        %v792 = vmul.f32 %v786, 0.70710677
        %v793 = vand.u32 2147483647, %v791
        %v794 = vand.u32 2147483647, %v792
        %v795 = vmul.f32 %v793, 0.3275911
        %v796 = vmul.f32 %v794, 0.3275911
        %v797 = vadd.f32 %v795, 1.0
        %v798 = vadd.f32 %v796, 1.0
        %v799 = vrcp.pop %v797
        %v800 = vrcp.pop %v798
        %v801 = vmul.f32 %v799, 1.0614054
        %v802 = vmul.f32 %v800, 1.0614054
        %v803 = vadd.f32 %v801, -1.4531521
        %v804 = vadd.f32 %v802, -1.4531521
        %v805 = vmul.f32 %v803, %v799
        %v806 = vmul.f32 %v804, %v800
        %v807 = vadd.f32 %v805, 1.4214138
        %v808 = vadd.f32 %v806, 1.4214138
        %v809 = vmul.f32 %v807, %v799
        %v810 = vmul.f32 %v808, %v800
        %v811 = vadd.f32 %v809, -0.28449672
        %v812 = vadd.f32 %v810, -0.28449672
        %v813 = vmul.f32 %v811, %v799
        %v814 = vmul.f32 %v812, %v800
        %v815 = vadd.f32 %v813, 0.2548296
        %v816 = vadd.f32 %v814, 0.2548296
        %v817 = vmul.f32 %v815, %v799
        %v818 = vmul.f32 %v816, %v800
        %v819 = vsub.f32 0.0, %v793
        %v820 = vsub.f32 0.0, %v794
        %v821 = vmul.f32 %v819, %v793
        %v822 = vmul.f32 %v820, %v794
        %v823 = vmul.f32 %v821, 1.442695
        %v824 = vpow.pop %v823
        %v825 = vmul.f32 %v822, 1.442695
        %v826 = vpow.pop %v825
        %v827 = vmul.f32 %v817, %v824
        %v828 = vmul.f32 %v818, %v826
        %v829 = vsub.f32 1.0, %v827
        %v830 = vsub.f32 1.0, %v828
        %vm831 = vcmp.ge.f32.partialorder %v791, 0.0
        %vm832 = vcmp.ge.f32.partialorder %v792, 0.0
        %v833 = vsub.f32 0.0, %v829
        %v834 = vsub.f32 0.0, %v830
        %v835 = vsel %vm831, %v829, %v833
        %v836 = vsel %vm832, %v830, %v834
        %v837 = vadd.f32 %v835, 1.0
        %v838 = vadd.f32 %v836, 1.0
        %v839 = vmul.f32 %v789, %v837
        %v840 = vmul.f32 %v790, %v838
        %v841 = vpack.c.bf16 %v840, %v839
        %v842 = vld [vmem:[#allocation12] sm:$0xf]
        %v843 = vld [vmem:[#allocation12 + $0x4] sm:$0xf]
        %v844 = vld [vmem:[#allocation12 + $0x8] sm:$0xf]
        %v845 = vld [vmem:[#allocation12 + $0xc] sm:$0xf]
        %v846 = vld [vmem:[#allocation12 + $0x10] sm:$0xf]
        %v847 = vld [vmem:[#allocation12 + $0x14] sm:$0xf]
        %v848 = vld [vmem:[#allocation12 + $0x18] sm:$0xf]
        %v849 = vld [vmem:[#allocation12 + $0x1c] sm:$0xf]
        %v850 = vld [vmem:[#allocation18 + $0x6] sm:$0x1]
        %v851 = vlaneseq
        %v852 = vshrl.u32 %v851, 7
        %v853 = vsub.s32 0, %v852
        %v854 = vrot.slane %v850, %v853
        %v863 = vunpack.c.l.b16 %v842
        %v864 = vunpack.c.l.b16 %v843
        %v865 = vunpack.c.l.b16 %v844
        %v866 = vunpack.c.l.b16 %v845
        %v867 = vunpack.c.l.b16 %v846
        %v868 = vunpack.c.l.b16 %v847
        %v869 = vunpack.c.l.b16 %v848
        %v870 = vunpack.c.l.b16 %v849
        %v871 = vpack.c.b16 %v864, %v863
        %v872 = vpack.c.b16 %v866, %v865
        %v873 = vpack.c.b16 %v868, %v867
        %v874 = vpack.c.b16 %v870, %v869
        %vm879 = vcmask 523264
        %v881 = vsel %vm879, %v841, 0
        %883 = vmatprep.subr.bf16.mxu0 0
        %884 = vmatpush1.bf16.msra.mxu0 %v871
        %885 = vmatprep.subr.bf16.mxu0 0
        %886 = vmatpush1.bf16.msra.mxu0 %v872
        %887 = vmatprep.subr.bf16.mxu0 0
        %888 = vmatpush1.bf16.msra.mxu0 %v873
        %889 = vmatprep.subr.bf16.mxu0 0
        %890 = vmatpush1.bf16.msra.mxu0 %v874
        %891 = vmatprep.subr.bf16.mxu0 0
        %892 = vmatpush1.bf16.msra.mxu0 0
        %893 = vmatprep.subr.bf16.mxu0 0
        %894 = vmatpush1.bf16.msra.mxu0 0
        %895 = vmatprep.subr.bf16.mxu0 0
        %896 = vmatpush1.bf16.msra.mxu0 0
        %897 = vmatprep.subr.bf16.mxu0 0
        %898 = vmatpush1.bf16.msra.mxu0 0
        %899 = vmatprep.subr.bf16.mxu0 0
        %900 = vmatpush1.bf16.msra.mxu0 0
        %901 = vmatprep.subr.bf16.mxu0 0
        %902 = vmatpush1.bf16.msra.mxu0 0
        %903 = vmatprep.subr.bf16.mxu0 0
        %904 = vmatpush1.bf16.msra.mxu0 0
        %905 = vmatprep.subr.bf16.mxu0 0
        %906 = vmatpush1.bf16.msra.mxu0 0
        %907 = vmatprep.subr.bf16.mxu0 0
        %908 = vmatpush1.bf16.msra.mxu0 0
        %909 = vmatprep.subr.bf16.mxu0 0
        %910 = vmatpush1.bf16.msra.mxu0 0
        %911 = vmatprep.subr.bf16.mxu0 0
        %912 = vmatpush1.bf16.msra.mxu0 0
        %913 = vmatprep.subr.bf16.mxu0 0
        %914 = vmatpush1.bf16.msra.mxu0 0
        %915 = vmatprep.mubr.bf16.mxu0 0
        %916 = vmatmul.mubr.bf16.gmra.mrb[0].mxu0 %v881
        %v917 = vpop.f32.mrb[0].mxu0
        %v918 = vadd.f32 %v854, %v917
        %v919 = vpop.f32.mrb[0].mxu0
        %v920 = vpop.f32.mrb[0].mxu0
        %v921 = vadd.f32 %v854, %v920
        %v922 = vpop.f32.mrb[0].mxu0
        %923 = vdwg.mxu0
        %v924 = vadd.f32 %v514, %v918
        %v925 = vadd.f32 %v515, %v921
        %v926 = vadd.f32 %v924, %v468
        %v927 = vadd.f32 %v925, %v469
        %v928 = vld [vmem:[#allocation18 + $0x7] sm:$0x1]
        %v929 = vld [vmem:[#allocation18 + $0x8] sm:$0x1]
        %v930 = vsel %vm472, %v926, 0.0
        %931 = vadd.xlane.f32.xlu0 %v930
        %v932 = vpop.xlane.xlu0 %931
        %v933 = vsel %vm472, %v927, 0.0
        %934 = vadd.xlane.f32.xlu0 %v933
        %v935 = vpop.xlane.xlu0 %934
        %v936 = vmul.f32 %v932, %v479
        %v937 = vmul.f32 %v935, %v479
        %v938 = vmul.f32 %v926, %v926
        %v939 = vmul.f32 %v927, %v927
        %v940 = vsel %vm472, %v938, 0.0
        %941 = vadd.xlane.f32.xlu0 %v940
        %v942 = vpop.xlane.xlu0 %941
        %v943 = vsel %vm472, %v939, 0.0
        %944 = vadd.xlane.f32.xlu0 %v943
        %v945 = vpop.xlane.xlu0 %944
        %v946 = vmul.f32 %v942, %v479
        %v947 = vmul.f32 %v945, %v479
        %v948 = vmul.f32 %v936, %v936
        %v949 = vmul.f32 %v937, %v937
        %v950 = vsub.f32 %v946, %v948
        %v951 = vsub.f32 %v947, %v949
        %v952 = vsub.f32 %v926, %v936
        %v953 = vsub.f32 %v927, %v937
        %v954 = vadd.f32 %v950, 1e-05
        %v955 = vadd.f32 %v951, 1e-05
        %v956 = vrsqrt.pop %v954
        %v957 = vrsqrt.pop %v955
        %v958 = vmul.f32 %v952, %v956
        %v959 = vmul.f32 %v953, %v957
        %v960 = vlaneseq
        %v961 = vshrl.u32 %v960, 7
        %v962 = vsub.s32 0, %v961
        %v963 = vrot.slane %v928, %v962
        %v964 = vmul.f32 %v958, %v963
        %v965 = vmul.f32 %v959, %v963
        %v966 = vlaneseq
        %v967 = vshrl.u32 %v966, 7
        %v968 = vsub.s32 0, %v967
        %v969 = vrot.slane %v929, %v968
        %v970 = vadd.f32 %v964, %v969
        %v971 = vadd.f32 %v965, %v969
        %v972 = vpack.c.bf16 %v971, %v970
        %v973 = vld [vmem:[#allocation13] sm:$0xf]
        %v974 = vld [vmem:[#allocation13 + $0x4] sm:$0xf]
        %v975 = vld [vmem:[#allocation13 + $0x8] sm:$0xf]
        %v976 = vld [vmem:[#allocation13 + $0xc] sm:$0xf]
        %v977 = vld [vmem:[#allocation18 + $0x9] sm:$0x1]
        %v978 = vlaneseq
        %v979 = vshrl.u32 %v978, 7
        %v980 = vsub.s32 0, %v979
        %v981 = vrot.slane %v977, %v980
        %v986 = vunpack.c.l.b16 %v973
        %v987 = vunpack.c.l.b16 %v974
        %v988 = vunpack.c.l.b16 %v975
        %v989 = vunpack.c.l.b16 %v976
        %v990 = vpack.c.b16 %v987, %v986
        %v991 = vpack.c.b16 %v989, %v988
        %v995 = vsel %vm472, %v972, 0
        %997 = vmatprep.subr.bf16.mxu0 0
        %998 = vmatpush1.bf16.msra.mxu0 %v990
        %999 = vmatprep.subr.bf16.mxu0 0
        %1000 = vmatpush1.bf16.msra.mxu0 %v991
        %1001 = vmatprep.subr.bf16.mxu0 0
        %1002 = vmatpush1.bf16.msra.mxu0 0
        %1003 = vmatprep.subr.bf16.mxu0 0
        %1004 = vmatpush1.bf16.msra.mxu0 0
        %1005 = vmatprep.subr.bf16.mxu0 0
        %1006 = vmatpush1.bf16.msra.mxu0 0
        %1007 = vmatprep.subr.bf16.mxu0 0
        %1008 = vmatpush1.bf16.msra.mxu0 0
        %1009 = vmatprep.subr.bf16.mxu0 0
        %1010 = vmatpush1.bf16.msra.mxu0 0
        %1011 = vmatprep.subr.bf16.mxu0 0
        %1012 = vmatpush1.bf16.msra.mxu0 0
        %1013 = vmatprep.subr.bf16.mxu0 0
        %1014 = vmatpush1.bf16.msra.mxu0 0
        %1015 = vmatprep.subr.bf16.mxu0 0
        %1016 = vmatpush1.bf16.msra.mxu0 0
        %1017 = vmatprep.subr.bf16.mxu0 0
        %1018 = vmatpush1.bf16.msra.mxu0 0
        %1019 = vmatprep.subr.bf16.mxu0 0
        %1020 = vmatpush1.bf16.msra.mxu0 0
        %1021 = vmatprep.subr.bf16.mxu0 0
        %1022 = vmatpush1.bf16.msra.mxu0 0
        %1023 = vmatprep.subr.bf16.mxu0 0
        %1024 = vmatpush1.bf16.msra.mxu0 0
        %1025 = vmatprep.subr.bf16.mxu0 0
        %1026 = vmatpush1.bf16.msra.mxu0 0
        %1027 = vmatprep.subr.bf16.mxu0 0
        %1028 = vmatpush1.bf16.msra.mxu0 0
        %1029 = vmatprep.mubr.bf16.mxu0 0
        %1030 = vmatmul.mubr.bf16.gmra.mrb[0].mxu0 %v995
        %v1031 = vpop.f32.mrb[0].mxu0
        %v1032 = vadd.f32 %v981, %v1031
        %v1033 = vpop.f32.mrb[0].mxu0
        %v1034 = vpop.f32.mrb[0].mxu0
        %v1035 = vadd.f32 %v981, %v1034
        %v1036 = vpop.f32.mrb[0].mxu0
        %1037 = vdwg.mxu0
        %v1038 = vld [vmem:[#allocation15] sm:$0xf]
        %v1039 = vld [vmem:[#allocation15 + $0x4] sm:$0xf]
        %v1040 = vld [vmem:[#allocation15 + $0x8] sm:$0xf]
        %v1041 = vld [vmem:[#allocation15 + $0xc] sm:$0xf]
        %v1042 = vld [vmem:[#allocation18 + $0xa] sm:$0x1]
        %v1043 = vlaneseq
        %v1044 = vshrl.u32 %v1043, 7
        %v1045 = vsub.s32 0, %v1044
        %v1046 = vrot.slane %v1042, %v1045
        %v1051 = vunpack.c.l.b16 %v1038
        %v1052 = vunpack.c.l.b16 %v1039
        %v1053 = vunpack.c.l.b16 %v1040
        %v1054 = vunpack.c.l.b16 %v1041
        %v1055 = vpack.c.b16 %v1052, %v1051
        %v1056 = vpack.c.b16 %v1054, %v1053
        %1059 = vmatprep.subr.bf16.mxu0 0
        %1060 = vmatpush1.bf16.msra.mxu0 %v1055
        %1061 = vmatprep.subr.bf16.mxu0 0
        %1062 = vmatpush1.bf16.msra.mxu0 %v1056
        %1063 = vmatprep.subr.bf16.mxu0 0
        %1064 = vmatpush1.bf16.msra.mxu0 0
        %1065 = vmatprep.subr.bf16.mxu0 0
        %1066 = vmatpush1.bf16.msra.mxu0 0
        %1067 = vmatprep.subr.bf16.mxu0 0
        %1068 = vmatpush1.bf16.msra.mxu0 0
        %1069 = vmatprep.subr.bf16.mxu0 0
        %1070 = vmatpush1.bf16.msra.mxu0 0
        %1071 = vmatprep.subr.bf16.mxu0 0
        %1072 = vmatpush1.bf16.msra.mxu0 0
        %1073 = vmatprep.subr.bf16.mxu0 0
        %1074 = vmatpush1.bf16.msra.mxu0 0
        %1075 = vmatprep.subr.bf16.mxu0 0
        %1076 = vmatpush1.bf16.msra.mxu0 0
        %1077 = vmatprep.subr.bf16.mxu0 0
        %1078 = vmatpush1.bf16.msra.mxu0 0
        %1079 = vmatprep.subr.bf16.mxu0 0
        %1080 = vmatpush1.bf16.msra.mxu0 0
        %1081 = vmatprep.subr.bf16.mxu0 0
        %1082 = vmatpush1.bf16.msra.mxu0 0
        %1083 = vmatprep.subr.bf16.mxu0 0
        %1084 = vmatpush1.bf16.msra.mxu0 0
        %1085 = vmatprep.subr.bf16.mxu0 0
        %1086 = vmatpush1.bf16.msra.mxu0 0
        %1087 = vmatprep.subr.bf16.mxu0 0
        %1088 = vmatpush1.bf16.msra.mxu0 0
        %1089 = vmatprep.subr.bf16.mxu0 0
        %1090 = vmatpush1.bf16.msra.mxu0 0
        %1091 = vmatprep.mubr.bf16.mxu0 0
        %1092 = vmatmul.mubr.bf16.gmra.mrb[0].mxu0 %v995
        %v1093 = vpop.f32.mrb[0].mxu0
        %v1094 = vadd.f32 %v1046, %v1093
        %v1095 = vpop.f32.mrb[0].mxu0
        %v1096 = vpop.f32.mrb[0].mxu0
        %v1097 = vadd.f32 %v1046, %v1096
        %v1098 = vpop.f32.mrb[0].mxu0
        %1099 = vdwg.mxu0
        %vm1100 = vcmask 778240
        %1101 = vst.msk [vmem:[#allocation3] sm:$0x1] %vm1100, 0.0
        %1102 = vst.msk [vmem:[#allocation3 + $0x11] sm:$0x1] %vm1100, 0.0
        %vm1103 = vcmask 785408
        %1104 = vst.msk [vmem:[#allocation3 + $0x1] sm:$0xff] %vm1103, %v1032
        %1105 = vst.msk [vmem:[#allocation3 + $0x9] sm:$0xff] %vm1103, %v1035
        %v1106 = vld [vmem:[#allocation18 + $0x13] sm:$0x1]
        %v1107 = vld [vmem:[#allocation3] sm:$0xff]
        %v1108 = vld [vmem:[#allocation3 + $0x8] sm:$0xff]
        %v1109 = vlaneseq
        %v1110 = vshrl.u32 %v1109, 7
        %v1111 = vsub.s32 0, %v1110
        %v1112 = vrot.slane %v1106, %v1111
        %v1113 = vmul.f32 %v1112, %v1107
        %v1114 = vmul.f32 %v1112, %v1108
        %v1115 = vld [vmem:[#allocation18 + $0x14] sm:$0x1]
        %v1116 = vld [vmem:[#allocation3 + $0x1] sm:$0xff]
        %v1117 = vld [vmem:[#allocation3 + $0x9] sm:$0xff]
        %v1118 = vlaneseq
        %v1119 = vshrl.u32 %v1118, 7
        %v1120 = vsub.s32 0, %v1119
        %v1121 = vrot.slane %v1115, %v1120
        %v1122 = vmul.f32 %v1121, %v1116
        %v1123 = vmul.f32 %v1121, %v1117
        %v1124 = vadd.f32 %v1113, %v1122
        %v1125 = vadd.f32 %v1114, %v1123
        %v1126 = vld [vmem:[#allocation18 + $0x15] sm:$0x1]
        %v1127 = vld [vmem:[#allocation3 + $0x2] sm:$0xff]
        %v1128 = vld [vmem:[#allocation3 + $0xa] sm:$0xff]
        %v1129 = vlaneseq
        %v1130 = vshrl.u32 %v1129, 7
        %v1131 = vsub.s32 0, %v1130
        %v1132 = vrot.slane %v1126, %v1131
        %v1133 = vmul.f32 %v1132, %v1127
        %v1134 = vmul.f32 %v1132, %v1128
        %v1135 = vadd.f32 %v1124, %v1133
        %v1136 = vadd.f32 %v1125, %v1134
        %v1137 = vld [vmem:[#allocation18 + $0xb] sm:$0x1]
        %v1138 = vlaneseq
        %v1139 = vshrl.u32 %v1138, 7
        %v1140 = vsub.s32 0, %v1139
        %v1141 = vrot.slane %v1137, %v1140
        %v1142 = vadd.f32 %v1135, %v1141
        %v1143 = vadd.f32 %v1136, %v1141
        %1144 = vst.msk [vmem:[#allocation3] sm:$0x1] %vm1100, 0.0
        %1145 = vst.msk [vmem:[#allocation3 + $0x11] sm:$0x1] %vm1100, 0.0
        %1146 = vst.msk [vmem:[#allocation3 + $0x1] sm:$0xff] %vm1103, %v1094
        %1147 = vst.msk [vmem:[#allocation3 + $0x9] sm:$0xff] %vm1103, %v1097
        %v1148 = vld [vmem:[#allocation18 + $0x16] sm:$0x1]
        %v1149 = vld [vmem:[#allocation3] sm:$0xff]
        %v1150 = vld [vmem:[#allocation3 + $0x8] sm:$0xff]
        %v1151 = vlaneseq
        %v1152 = vshrl.u32 %v1151, 7
        %v1153 = vsub.s32 0, %v1152
        %v1154 = vrot.slane %v1148, %v1153
        %v1155 = vmul.f32 %v1154, %v1149
        %v1156 = vmul.f32 %v1154, %v1150
        %v1157 = vld [vmem:[#allocation18 + $0x17] sm:$0x1]
        %v1158 = vld [vmem:[#allocation3 + $0x1] sm:$0xff]
        %v1159 = vld [vmem:[#allocation3 + $0x9] sm:$0xff]
        %v1160 = vlaneseq
        %v1161 = vshrl.u32 %v1160, 7
        %v1162 = vsub.s32 0, %v1161
        %v1163 = vrot.slane %v1157, %v1162
        %v1164 = vmul.f32 %v1163, %v1158
        %v1165 = vmul.f32 %v1163, %v1159
        %v1166 = vadd.f32 %v1155, %v1164
        %v1167 = vadd.f32 %v1156, %v1165
        %v1168 = vld [vmem:[#allocation18 + $0x18] sm:$0x1]
        %v1169 = vld [vmem:[#allocation3 + $0x2] sm:$0xff]
        %v1170 = vld [vmem:[#allocation3 + $0xa] sm:$0xff]
        %v1171 = vlaneseq
        %v1172 = vshrl.u32 %v1171, 7
        %v1173 = vsub.s32 0, %v1172
        %v1174 = vrot.slane %v1168, %v1173
        %v1175 = vmul.f32 %v1174, %v1169
        %v1176 = vmul.f32 %v1174, %v1170
        %v1177 = vadd.f32 %v1166, %v1175
        %v1178 = vadd.f32 %v1167, %v1176
        %v1179 = vld [vmem:[#allocation18 + $0xc] sm:$0x1]
        %v1180 = vlaneseq
        %v1181 = vshrl.u32 %v1180, 7
        %v1182 = vsub.s32 0, %v1181
        %v1183 = vrot.slane %v1179, %v1182
        %v1184 = vadd.f32 %v1177, %v1183
        %v1185 = vadd.f32 %v1178, %v1183
        %v1186 = vxor.u32 %v1184, 2147483648
        %v1187 = vxor.u32 %v1185, 2147483648
        %v1188 = vmul.f32 %v1186, 1.442695
        %v1189 = vpow.pop %v1188
        %v1190 = vmul.f32 %v1187, 1.442695
        %v1191 = vpow.pop %v1190
        %v1192 = vadd.f32 %v1189, 1.0
        %v1193 = vadd.f32 %v1191, 1.0
        %v1194 = vrcp.pop %v1192
        %v1195 = vmul.f32 1.0, %v1194
        %v1196 = vrcp.pop %v1193
        %v1197 = vmul.f32 1.0, %v1196
        %v1198 = vmul.f32 %v1142, %v1195
        %v1199 = vmul.f32 %v1143, %v1197
        %v1200 = vpack.c.bf16 %v1199, %v1198
        %v1201 = vld [vmem:[#allocation16] sm:$0xf]
        %v1202 = vld [vmem:[#allocation16 + $0x4] sm:$0xf]
        %v1203 = vld [vmem:[#allocation16 + $0x8] sm:$0xf]
        %v1204 = vld [vmem:[#allocation16 + $0xc] sm:$0xf]
        %v1205 = vld [vmem:[#allocation16 + $0x10] sm:$0xf]
        %v1206 = vld [vmem:[#allocation16 + $0x14] sm:$0xf]
        %v1207 = vld [vmem:[#allocation16 + $0x18] sm:$0xf]
        %v1208 = vld [vmem:[#allocation16 + $0x1c] sm:$0xf]
        %v1209 = vld [vmem:[#allocation16 + $0x20] sm:$0xf]
        %v1210 = vld [vmem:[#allocation16 + $0x24] sm:$0xf]
        %v1211 = vld [vmem:[#allocation16 + $0x28] sm:$0xf]
        %v1212 = vld [vmem:[#allocation16 + $0x2c] sm:$0xf]
        %v1213 = vld [vmem:[#allocation18 + $0xd] sm:$0x1]
        %v1214 = vlaneseq
        %v1215 = vshrl.u32 %v1214, 7
        %v1216 = vsub.s32 0, %v1215
        %v1217 = vrot.slane %v1213, %v1216
        %v1230 = vunpack.c.l.b16 %v1201
        %v1231 = vunpack.c.l.b16 %v1202
        %v1232 = vunpack.c.l.b16 %v1203
        %v1233 = vunpack.c.l.b16 %v1204
        %v1234 = vunpack.c.l.b16 %v1205
        %v1235 = vunpack.c.l.b16 %v1206
        %v1236 = vunpack.c.l.b16 %v1207
        %v1237 = vunpack.c.l.b16 %v1208
        %v1238 = vunpack.c.l.b16 %v1209
        %v1239 = vunpack.c.l.b16 %v1210
        %v1240 = vunpack.c.l.b16 %v1211
        %v1241 = vunpack.c.l.b16 %v1212
        %v1242 = vpack.c.b16 %v1231, %v1230
        %v1243 = vpack.c.b16 %v1233, %v1232
        %v1244 = vpack.c.b16 %v1235, %v1234
        %v1245 = vpack.c.b16 %v1237, %v1236
        %v1246 = vpack.c.b16 %v1239, %v1238
        %v1247 = vpack.c.b16 %v1241, %v1240
        %v1255 = vsel %vm1103, %v1200, 0
        %1257 = vmatprep.subr.bf16.mxu0 0
        %1258 = vmatpush1.bf16.msra.mxu0 %v1242
        %1259 = vmatprep.subr.bf16.mxu0 0
        %1260 = vmatpush1.bf16.msra.mxu0 %v1243
        %1261 = vmatprep.subr.bf16.mxu0 0
        %1262 = vmatpush1.bf16.msra.mxu0 %v1244
        %1263 = vmatprep.subr.bf16.mxu0 0
        %1264 = vmatpush1.bf16.msra.mxu0 %v1245
        %1265 = vmatprep.subr.bf16.mxu0 0
        %1266 = vmatpush1.bf16.msra.mxu0 %v1246
        %1267 = vmatprep.subr.bf16.mxu0 0
        %1268 = vmatpush1.bf16.msra.mxu0 %v1247
        %1269 = vmatprep.subr.bf16.mxu0 0
        %1270 = vmatpush1.bf16.msra.mxu0 0
        %1271 = vmatprep.subr.bf16.mxu0 0
        %1272 = vmatpush1.bf16.msra.mxu0 0
        %1273 = vmatprep.subr.bf16.mxu0 0
        %1274 = vmatpush1.bf16.msra.mxu0 0
        %1275 = vmatprep.subr.bf16.mxu0 0
        %1276 = vmatpush1.bf16.msra.mxu0 0
        %1277 = vmatprep.subr.bf16.mxu0 0
        %1278 = vmatpush1.bf16.msra.mxu0 0
        %1279 = vmatprep.subr.bf16.mxu0 0
        %1280 = vmatpush1.bf16.msra.mxu0 0
        %1281 = vmatprep.subr.bf16.mxu0 0
        %1282 = vmatpush1.bf16.msra.mxu0 0
        %1283 = vmatprep.subr.bf16.mxu0 0
        %1284 = vmatpush1.bf16.msra.mxu0 0
        %1285 = vmatprep.subr.bf16.mxu0 0
        %1286 = vmatpush1.bf16.msra.mxu0 0
        %1287 = vmatprep.subr.bf16.mxu0 0
        %1288 = vmatpush1.bf16.msra.mxu0 0
        %1289 = vmatprep.mubr.bf16.mxu0 0
        %1290 = vmatmul.mubr.bf16.gmra.mrb[0].mxu0 %v1255
        %v1291 = vpop.f32.mrb[0].mxu0
        %v1292 = vadd.f32 %v1217, %v1291
        %v1293 = vpop.f32.mrb[0].mxu0
        %v1294 = vpop.f32.mrb[0].mxu0
        %v1295 = vadd.f32 %v1217, %v1294
        %v1296 = vpop.f32.mrb[0].mxu0
        %1297 = vdwg.mxu0
        %v1298 = vadd.f32 %v970, %v1292
        %v1299 = vadd.f32 %v971, %v1295
        %v1300 = vadd.f32 %v1298, %v926
        %v1301 = vadd.f32 %v1299, %v927
        %1302 = vst.msk [vmem:[%s466] sm:$0xff] %vm472, %v1300
        %1303 = vst.msk [vmem:[%s466 + $0x8] sm:$0xff] %vm472, %v1301
        %s1304 = sand.u32 %s232, 1
        %s1305 = scalar_lea.sflag [#allocation6], %s1304
        %s1306 = sand.u32 %s232, 1
        %s1307 = smul.addr %s1306, 16
        %s1308 = scalar_lea.vmem [#allocation19], %s1307
        // Predicated region
        $region93: #{local_transformer.1} parent=55 // pred_check
          %p1309 = pneg %p242
        $region94: #{local_transformer.1} parent=55 // pred_check_branch
          %1311 = sbr.rel (%p1309) target = $region96
        $region95: #{local_transformer.1} parent=55 // pred_region
          %s1313 = ssub.s32 256, 256
          %1314 = vsyncadd %s1305, %s1313
          %s1315 = smul.addr %s30, 2
          %s1316 = smul.addr %s1315, 128
          %s1317 = scalar_lea.hbm %s9, %s1316
          %s1318 = sshll.u32 %s1308, 4
          %s1319 = int_to_ptr.vmem [resolvable:$true] %s1318
          %1324 = dma.vmem_to_hbm [thread:$0]  %s1319, 256, %s1317, %s1305, 128, 128, 8
        $region96: #{local_transformer.1} parent=55 // pred_fallthru
          _
      $region56: #{local_transformer.1} parent=5 // pred_fallthru
        _
      %p1325 = scmp.le.s32.totalorder 2, %s25
      // Predicated region
      $region97: #{local_transformer.1} parent=5 // pred_check
        %p1326 = pneg %p1325
      $region98: #{local_transformer.1} parent=5 // pred_check_branch
        %1328 = sbr.rel (%p1326) target = $region100
      $region99: #{local_transformer.1} parent=5 // pred_region
        %s1329 = ssub.s32 %s25, 2
        // Predicated region
        $region101: #{local_transformer.1} parent=99 // pred_check
          %p1330 = pneg %p248
        $region102: #{local_transformer.1} parent=99 // pred_check_branch
          %1332 = sbr.rel (%p1330) target = $region104
        $region103: #{local_transformer.1} parent=99 // pred_region
          %s1333 = sand.u32 %s233, 1
          %s1334 = scalar_lea.sflag [#allocation6], %s1333
          %s1335 = sand.u32 %s233, 1
          %s1336 = smul.addr %s1335, 16
          %s1337 = scalar_lea.vmem [#allocation19], %s1336
          %1338 = dma.done %s1334, 256
        $region104: #{local_transformer.1} parent=99 // pred_fallthru
          _
      $region100: #{local_transformer.1} parent=5 // pred_fallthru
        _
    $region6: #{local_transformer.1} parent=1 // loop_footer
      %s29 = sadd.s32 1, %s25
    $region7: #{local_transformer.1} parent=1 // loop_footer_branch
      %24 = sbr.rel target = $region3
    $region8: #{local_transformer.1} parent=1 // loop_exit
      _
    %1339 = vsyncpa [#allocation5], 1
    %s1340 = scalar_lea.sflag [#allocation5], 1
    %1341 = vsyncpa %s1340, 1
    %1342 = vsyncpa [#allocation8], 1
    %1343 = vsyncpa [#allocation11], 1
    %1344 = vsyncpa [#allocation14], 1
    %1345 = vsyncpa [#allocation17], 1
    %1346 = vsyncpa [#allocation6], 1
    %s1347 = scalar_lea.sflag [#allocation6], 1
    %1348 = vsyncpa %s1347, 1

</llo_original>
